<compile_context>
chip_gen: v7x
topology: tpu7x:2x2x1
jax: 0.10.0
libtpu: 0.0.40
codegen_flags: <defaults>
</compile_context>

<pallas_src>
import jax
import jax.numpy as jnp
from jax.experimental import pallas as pl
from jax.experimental.pallas import tpu as pltpu


def _round_up(x, m):
    return (x + m - 1) // m * m


def _vmem_capacity_bytes():
    # Per-generation physical VMEM (v5e/v6e: 128 MiB, v7x: 64 MiB per core).
    try:
        return int(pltpu.get_tpu_info().vmem_capacity_bytes)
    except Exception:
        return 64 * 1024 * 1024  # conservative (v7x)


# ---------------------------------------------------------------------------
# Kernels
# ---------------------------------------------------------------------------

def _linear_bias_relu_resident_kernel(x_ref, w_ref, b_ref, o_ref):
    # x: (TM, Kp) bf16, w: (Kp, Np) bf16 (VMEM-resident across the M grid),
    # b: (1, Np) f32, o: (TM, Np).  Single MXU matmul, bias + ReLU in f32.
    y = jnp.dot(x_ref[...], w_ref[...], preferred_element_type=jnp.float32)
    o_ref[...] = jnp.maximum(y + b_ref[...], 0.0).astype(o_ref.dtype)


def _linear_bias_relu_tiled_kernel(x_ref, w_ref, b_ref, o_ref, acc_ref):
    # Fallback for layers whose weight does not fit VMEM: grid (M, N, K) with
    # K innermost ("arbitrary") and an f32 accumulator that persists across K.
    k = pl.program_id(2)

    @pl.when(k == 0)
    def _init():
        # Seed the accumulator with the broadcast bias (saves a separate
        # full-tile add in the epilogue).
        acc_ref[...] = jnp.broadcast_to(b_ref[...], acc_ref.shape)

    acc_ref[...] += jnp.dot(x_ref[...], w_ref[...],
                            preferred_element_type=jnp.float32)

    @pl.when(k == pl.num_programs(2) - 1)
    def _finalize():
        o_ref[...] = jnp.maximum(acc_ref[...], 0.0).astype(o_ref.dtype)


# ---------------------------------------------------------------------------
# Wrappers
# ---------------------------------------------------------------------------

def _prepare_params(w, b):
    """Cast static params to bf16/f32 and pad lane dims to multiples of 128."""
    K, N = w.shape
    Kp, Np = _round_up(K, 128), _round_up(N, 128)
    wb = w.astype(jnp.bfloat16)
    bf = b.astype(jnp.float32).reshape(1, N)
    if (Kp, Np) != (K, N):
        wb = jnp.pad(wb, ((0, Kp - K), (0, Np - N)))
    if Np != N:
        bf = jnp.pad(bf, ((0, 0), (0, Np - N)))
    return wb, bf, N


def _linear_relu_on_padded(x, w_pad, b_pad, n_out, *, out_dtype=jnp.float32,
                           force_tiled=False):
    """relu(x @ w + b) given an already bf16-cast, lane-padded weight/bias."""
    M, K = x.shape
    Kp, Np = w_pad.shape
    assert K <= Kp and b_pad.shape == (1, Np)
    out_itemsize = jnp.dtype(out_dtype).itemsize

    # Per-microbatch activation cast (unavoidable); padding applied per path.
    xb = x.astype(jnp.bfloat16)

    cap = _vmem_capacity_bytes()
    vmem_cap = min(48 * 1024 * 1024, int(0.75 * cap))   # headroom under v7x
    budget = int(0.6 * cap)                              # resident-path budget

    # Row-tile choice: 256 rows feeds v6e/v7x's 256x256 MXU; for smaller M
    # keep >= 2 parallel blocks so v7x's two TensorCores both get work
    # (a single harmless extra grid step on single-core v5e/v6e).
    if M > 256:
        tm = 256
    elif M > 16:
        tm = _round_up((M + 1) // 2, 16)
    else:
        tm = 16
    m_pad = _round_up(M, tm)

    resident_ws = (2 * tm * Kp * 2            # x tiles, double-buffered, bf16
                   + 2 * Kp * Np * 2          # resident weight, bf16
                   + 2 * Np * 4               # bias
                   + 2 * tm * Np * out_itemsize)  # output tiles

    # ---------------- resident-weight fast path ----------------
    if not force_tiled and resident_ws <= budget:
        if (m_pad, Kp) != (M, K):
            xb = jnp.pad(xb, ((0, m_pad - M), (0, Kp - K)))
        grid = (m_pad // tm,)
        vmem_limit = min(max(int(1.5 * resident_ws), 16 * 1024 * 1024),
                         vmem_cap)
        cost = pl.CostEstimate(
            flops=2 * m_pad * Np * Kp,
            transcendentals=0,
            bytes_accessed=int(m_pad * Kp * 2      # x read once
                               + Kp * Np * 2       # w read once (resident)
                               + Np * 4
                               + m_pad * Np * out_itemsize),
        )
        out_pad = pl.pallas_call(
            _linear_bias_relu_resident_kernel,
            out_shape=jax.ShapeDtypeStruct((m_pad, Np), out_dtype),
            grid_spec=pltpu.PrefetchScalarGridSpec(
                num_scalar_prefetch=0,
                grid=grid,
                in_specs=[
                    pl.BlockSpec((tm, Kp), lambda i: (i, 0)),
                    pl.BlockSpec((Kp, Np), lambda i: (0, 0)),   # resident w
                    pl.BlockSpec((1, Np), lambda i: (0, 0)),
                ],
                out_specs=pl.BlockSpec((tm, Np), lambda i: (i, 0)),
            ),
            compiler_params=pltpu.CompilerParams(
                dimension_semantics=("parallel",),
                vmem_limit_bytes=vmem_limit,
            ),
            cost_estimate=cost,
        )(xb, w_pad, b_pad)
        return out_pad[:M, :n_out]

    # ---------------- tiled fallback (large layers) ----------------
    def _pick_div(total, cap_tile):
        t = min(cap_tile, total)
        while total % t:
            t -= 128
        return t

    tn_t = _pick_div(Np, 256)
    tk_t = _pick_div(Kp, 512)          # fat K steps (helps v5e's store slot)
    tm_t = 256 if M >= 256 else _round_up(M, 16)
    m_pad_t = _round_up(M, tm_t)

    if (m_pad_t, Kp) != (M, K):
        xb = jnp.pad(xb, ((0, m_pad_t - M), (0, Kp - K)))

    grid = (m_pad_t // tm_t, Np // tn_t, Kp // tk_t)
    tiled_ws = (2 * (tm_t * tk_t + tk_t * tn_t) * 2
                + 2 * tn_t * 4
                + tm_t * tn_t * 4
                + 2 * tm_t * tn_t * out_itemsize)
    vmem_limit = min(max(int(1.5 * tiled_ws), 16 * 1024 * 1024), vmem_cap)
    cost = pl.CostEstimate(
        flops=2 * m_pad_t * Np * Kp,
        transcendentals=0,
        bytes_accessed=int(m_pad_t * Kp * 2 * (Np // tn_t)    # x re-read / N tile
                           + Kp * Np * 2 * (m_pad_t // tm_t)  # w re-read / M tile
                           + Np * 4
                           + m_pad_t * Np * out_itemsize),
    )
    out_pad = pl.pallas_call(
        _linear_bias_relu_tiled_kernel,
        out_shape=jax.ShapeDtypeStruct((m_pad_t, Np), out_dtype),
        grid_spec=pltpu.PrefetchScalarGridSpec(
            num_scalar_prefetch=0,
            grid=grid,
            in_specs=[
                pl.BlockSpec((tm_t, tk_t), lambda i, j, k: (i, k)),
                pl.BlockSpec((tk_t, tn_t), lambda i, j, k: (k, j)),
                pl.BlockSpec((1, tn_t), lambda i, j, k: (0, j)),
            ],
            out_specs=pl.BlockSpec((tm_t, tn_t), lambda i, j, k: (i, j)),
            scratch_shapes=[pltpu.VMEM((tm_t, tn_t), jnp.float32)],
        ),
        compiler_params=pltpu.CompilerParams(
            dimension_semantics=("parallel", "parallel", "arbitrary"),
            vmem_limit_bytes=vmem_limit,
        ),
        cost_estimate=cost,
    )(xb, w_pad, b_pad)
    return out_pad[:M, :n_out]


def linear_relu(x, w, b, *, out_dtype=jnp.float32, force_tiled=False):
    """One-shot convenience wrapper (casts/pads the params on every call)."""
    w_pad, b_pad, n_out = _prepare_params(w, b)
    return _linear_relu_on_padded(x, w_pad, b_pad, n_out,
                                  out_dtype=out_dtype, force_tiled=force_tiled)


def make_linear_relu(w, b, *, out_dtype=jnp.float32):
    """Prepare (cast + pad) the static stage params ONCE; returns fn(x)->out.

    This is what the pipeline stage should hold so per-microbatch forwards
    only cast/pad the activation, not the weight.
    """
    w_pad, b_pad, n_out = _prepare_params(w, b)
    w_pad, b_pad = jax.block_until_ready((w_pad, b_pad))  # materialize now

    def apply(x):
        return _linear_relu_on_padded(x, w_pad, b_pad, n_out,
                                      out_dtype=out_dtype)
    return apply


# ---------------------------------------------------------------------------
# Pipeline-stage objects (mirrors the torch module's attributes)
# ---------------------------------------------------------------------------

class PipelineStageModel:
    """Synthetic stand-in for the pipeline-stage `model` object.

    Holds `inputs`, `outputs`, and the layer, mirroring what
    `Weight_Parallelized_Subdomain` expects (`model.inputs`, `model.outputs`,
    `model.layer`).
    """

    def __init__(self, key, batch, in_features, out_features):
        kx, kw, kb = jax.random.split(key, 3)
        bound = 1.0 / (in_features ** 0.5)
        self.weight = jax.random.uniform(
            kw, (in_features, out_features), jnp.float32, -bound, bound)
        self.bias = jax.random.uniform(
            kb, (1, out_features), jnp.float32, -bound, bound)
        self.inputs = jax.random.normal(kx, (batch, in_features), jnp.float32)
        self.outputs = None
        # Static params are bf16-cast and lane-padded once here, not per call.
        self.layer = make_linear_relu(self.weight, self.bias)


class WeightParallelizedSubdomain:
    """JAX/Pallas port of Weight_Parallelized_Subdomain (forward only)."""

    def __init__(self, model):
        self.model = model

    def forward(self):
        # self.model.outputs = self.model.layer(self.model.inputs)
        self.model.outputs = self.model.layer(self.model.inputs)
        return self.model.outputs

    # TODO(synk): backward()/grad()/grad_norm() rely on torch.autograd graph
    # state stored on the module; the JAX equivalent is jax.grad at the
    # wrapper level and is out of scope for this forward-pass kernel.


def _reference(x, w, b):
    # Reference with the same bf16 operand rounding the kernel applies.
    xb = x.astype(jnp.bfloat16).astype(jnp.float32)
    wb = w.astype(jnp.bfloat16).astype(jnp.float32)
    return jnp.maximum(xb @ wb + b.astype(jnp.float32).reshape(1, -1), 0.0)


if __name__ == "__main__":
    key = jax.random.PRNGKey(0)

    # Main run: resident-weight path, grid (2,) parallel (2 blocks -> both
    # v7x TensorCores busy; one extra cheap step on single-core v5e/v6e).
    batch, in_features, out_features = 256, 512, 512
    model = PipelineStageModel(key, batch, in_features, out_features)
    subdomain = WeightParallelizedSubdomain(model)

    out = subdomain.forward()
    out = jax.block_until_ready(out)
    ref = _reference(model.inputs, model.weight, model.bias)
    assert out.shape == (batch, out_features)
    assert jnp.allclose(out, ref, atol=1e-2, rtol=1e-2)

    # Secondary run: small, unaligned shapes exercise the padding path.
    model_small = PipelineStageModel(jax.random.PRNGKey(1), 8, 32, 48)
    out_small = WeightParallelizedSubdomain(model_small).forward()
    out_small = jax.block_until_ready(out_small)
    ref_small = _reference(model_small.inputs, model_small.weight,
                           model_small.bias)
    assert out_small.shape == (8, 48)
    assert jnp.allclose(out_small, ref_small, atol=1e-2, rtol=1e-2)

    # Third run: force the tiled K-reduction fallback (unaligned M/K/N,
    # multi-step K) so that path stays verified too.
    kx, kw, kb = jax.random.split(jax.random.PRNGKey(2), 3)
    Mt, Kt, Nt = 190, 1000, 384
    xt = jax.random.normal(kx, (Mt, Kt), jnp.float32)
    bnd = 1.0 / (Kt ** 0.5)
    wt = jax.random.uniform(kw, (Kt, Nt), jnp.float32, -bnd, bnd)
    bt = jax.random.uniform(kb, (1, Nt), jnp.float32, -bnd, bnd)
    out_t = jax.block_until_ready(linear_relu(xt, wt, bt, force_tiled=True))
    ref_t = _reference(xt, wt, bt)
    assert out_t.shape == (Mt, Nt)
    assert jnp.allclose(out_t, ref_t, atol=1e-2, rtol=1e-2)

    print("KERNEL_OK")
</pallas_src>

<mosaic_0001>
module attributes {stable_mosaic.version = 11 : i64} {
  func.func @_linear_bias_relu_resident_kernel(%arg0: i32, %arg1: memref<128x512xbf16, #tpu.memory_space<vmem>>, %arg2: memref<512x512xbf16, #tpu.memory_space<vmem>>, %arg3: memref<1x512xf32, #tpu.memory_space<vmem>>, %arg4: memref<128x512xf32, #tpu.memory_space<vmem>>) attributes {dimension_semantics = [#tpu.dimension_semantics<parallel>], iteration_bounds = array<i64: 2>, scalar_prefetch = 0 : i64, scratch_operands = 0 : i64, tpu.core_type = #tpu.core_type<tc>, window_params = [{transform_indices = @transform_0, window_bounds = array<i64: 128, 512>}, {pipeline_mode = #tpu.pipeline_mode<synchronous>, transform_indices = @transform_1, window_bounds = array<i64: 512, 512>}, {pipeline_mode = #tpu.pipeline_mode<synchronous>, transform_indices = @transform_2, window_bounds = array<i64: 1, 512>}, {transform_indices = @transform_3, window_bounds = array<i64: 128, 512>}]} {
    %c0 = arith.constant 0 : index
    %c0_0 = arith.constant 0 : index
    %0 = vector.load %arg1[%c0, %c0_0] : memref<128x512xbf16, #tpu.memory_space<vmem>>, vector<128x512xbf16>
    %c0_1 = arith.constant 0 : index
    %c0_2 = arith.constant 0 : index
    %1 = vector.load %arg2[%c0_1, %c0_2] : memref<512x512xbf16, #tpu.memory_space<vmem>>, vector<512x512xbf16>
    %cst = arith.constant dense<0.000000e+00> : vector<128x512xf32>
    %2 = tpu.matmul %0, %1, %cst {dimension_numbers = #tpu.dot_dimension_numbers<[1], [0], [0], [1], [0, 0, 1, 1], [], []>} : vector<128x512xbf16>, vector<512x512xbf16>, vector<128x512xf32> -> vector<128x512xf32>
    %c0_3 = arith.constant 0 : index
    %c0_4 = arith.constant 0 : index
    %3 = vector.load %arg3[%c0_3, %c0_4] : memref<1x512xf32, #tpu.memory_space<vmem>>, vector<1x512xf32>
    %4 = vector.broadcast %3 : vector<1x512xf32> to vector<128x512xf32>
    %5 = arith.addf %2, %4 : vector<128x512xf32>
    %cst_5 = arith.constant 0.000000e+00 : f32
    %6 = vector.broadcast %cst_5 : f32 to vector<128x512xf32>
    %7 = arith.maximumf %5, %6 : vector<128x512xf32>
    %c0_6 = arith.constant 0 : index
    %c0_7 = arith.constant 0 : index
    %8 = vector.load %arg4[%c0_6, %c0_7] : memref<128x512xf32, #tpu.memory_space<vmem>>, vector<128x512xf32>
    tpu.vector_store %arg4[%c0_6, %c0_7], %7 {strides = array<i32>} : memref<128x512xf32, #tpu.memory_space<vmem>>, vector<128x512xf32>,
    return
  }
  func.func @transform_0(%arg0: i32) -> (i32, i32) {
    %c0_i32 = arith.constant 0 : i32
    %c0_i32_0 = arith.constant 0 : i32
    return %arg0, %c0_i32 : i32, i32
  }
  func.func @transform_1(%arg0: i32) -> (i32, i32) {
    %c0_i32 = arith.constant 0 : i32
    %c0_i32_0 = arith.constant 0 : i32
    %c0_i32_1 = arith.constant 0 : i32
    return %c0_i32, %c0_i32_0 : i32, i32
  }
  func.func @transform_2(%arg0: i32) -> (i32, i32) {
    %c0_i32 = arith.constant 0 : i32
    %c0_i32_0 = arith.constant 0 : i32
    %c0_i32_1 = arith.constant 0 : i32
    return %c0_i32, %c0_i32_0 : i32, i32
  }
  func.func @transform_3(%arg0: i32) -> (i32, i32) {
    %c0_i32 = arith.constant 0 : i32
    %c0_i32_0 = arith.constant 0 : i32
    return %arg0, %c0_i32 : i32, i32
  }
}

</mosaic_0001>

<llo_original>
// kernel: tpu_custom_call.1
$region0: #{tpu_custom_call.1}
  #allocation0 [shape = 'u32[]', space=smem, size = 0x4, offset = 0x4, fixed_abs, tag = 'smem constant byte address 0x4 - core index']
  #allocation1 [shape = 'u32[144,128]{1,0:T(1,128)}', space=vmem, size = 0x12000, scoped, tag = 'internal scratch']
  %s0 = inlined_call_operand.hbm [shape: bf16[256,512], index: 0, kind: input, shape index: {}]
  %s1 = inlined_call_operand.hbm [shape: bf16[512,512], index: 1, kind: input, shape index: {}]
  %s2 = inlined_call_operand.vmem [shape: f32[1,512], index: 2, kind: input, shape index: {}]
  %s3 = inlined_call_operand.hbm [shape: f32[256,512], index: 3, kind: output, shape index: {}]
  %s4 = sld [smem:[#allocation0]]
  $region53: #{tpu_custom_call.1} parent=0
    _
  %s6 = ssub.s32 1, %s4
  %s7 = scalar_select 0, %s6, %s4
  $region1: #{tpu_custom_call.1} parent=0
    #allocation2 [shape = 'u8[262144]{0}', space=vmem, size = 0x40000, scoped, tag = 'input window, operand 0']
    #allocation3 [shape = 's32[2]{0}', space=sflag, size = 0x8, scoped, tag = 'scoped memory for tpu_custom_call.1']
    #allocation4 [shape = 's32[2]{0}', space=sflag, size = 0x8, scoped, tag = 'scoped memory for tpu_custom_call.1']
    #allocation5 [shape = 'u8[524288]{0}', space=vmem, size = 0x80000, scoped, tag = 'input window, operand 1, single buffered']
    #allocation6 [shape = 's32[1]{0}', space=sflag, size = 0x4, scoped, tag = 'scoped memory for tpu_custom_call.1']
    #allocation7 [shape = 'u8[524288]{0}', space=vmem, size = 0x80000, scoped, tag = 'output window, operand 0']
    %8 = vsyncpa [#allocation3], 0
    %s9 = scalar_lea.sflag [#allocation3], 1
    %10 = vsyncpa %s9, 0
    %11 = vsyncpa [#allocation6], 0
    %12 = vsyncpa [#allocation4], 0
    %s13 = scalar_lea.sflag [#allocation4], 1
    %14 = vsyncpa %s13, 0
    loop: start=0, step=1, limit=4
    $region2: #{tpu_custom_call.1} parent=1 // loop_pre_header
      _
    $region3: #{tpu_custom_call.1} parent=1 // loop_header
      %s16 = sphi 0, %s20
      %p17 = scmp.ge.s32.totalorder %s16, 4
      %s26 = sphi 0, %s28
      %s29 = sphi 0, %s26
      %s30 = sphi 0, %s29
      %s46 = sphi 0, %s30
      %s50 = sphi 0, %s50
      %s52 = sphi 0, %s50
      %s53 = sphi 0, %s52
      %s67 = sphi 0, %s53
      %s71 = sphi 0, %s71
      %s73 = sphi 0, %s71
      %s74 = sphi 0, %s73
      %s88 = sphi 0, %s74
      %s94 = sphi 0, %s96
      %s97 = sphi 0, %s94
      %s98 = sphi 0, %s97
      %s114 = sphi 0, %s98
    $region4: #{tpu_custom_call.1} parent=1 // loop_header_branch
      %19 = sbr.rel (%p17) target = $region8
    $region5: #{tpu_custom_call.1} parent=1 // loop_body
      %s21 = ssub.s32 %s16, 1
      %s22 = ssub.s32 %s16, 2
      %s23 = sadd.s32 %s16, 1
      %s24 = ssub.s32 %s16, %s23
      %p25 = scmp.eq.s32.totalorder %s24, 0
      %s27 = sadd.s32 %s26, 1
      %s28 = scalar_select %p25, %s26, %s27
      %p31 = pneg %p25
      %p32 = scmp.eq.s32.totalorder %s16, 1
      %p33 = por %p31, %p32
      %p34 = scmp.ne.s32.totalorder %s26, %s29
      %p35 = scmp.eq.s32.totalorder %s16, 0
      %p36 = por %p34, %p35
      %p37 = scmp.ne.s32.totalorder %s26, %s29
      %p38 = scmp.eq.s32.totalorder %s21, 1
      %p39 = por %p37, %p38
      %p40 = scmp.ne.s32.totalorder %s29, %s30
      %p41 = scmp.eq.s32.totalorder %s21, 0
      %p42 = por %p40, %p41
      %p43 = scmp.ne.s32.totalorder %s29, %s30
      %p44 = scmp.eq.s32.totalorder %s22, 1
      %p45 = por %p43, %p44
      %p47 = scmp.ne.s32.totalorder %s30, %s46
      %p48 = scmp.eq.s32.totalorder %s22, 0
      %p49 = por %p47, %p48
      %s51 = sadd.s32 %s50, 1
      %p54 = scmp.eq.s32.totalorder %s16, 1
      %p55 = scmp.ne.s32.totalorder %s50, %s52
      %p56 = scmp.eq.s32.totalorder %s16, 0
      %p57 = por %p55, %p56
      %p58 = scmp.ne.s32.totalorder %s50, %s52
      %p59 = scmp.eq.s32.totalorder %s21, 1
      %p60 = por %p58, %p59
      %p61 = scmp.ne.s32.totalorder %s52, %s53
      %p62 = scmp.eq.s32.totalorder %s21, 0
      %p63 = por %p61, %p62
      %p64 = scmp.ne.s32.totalorder %s52, %s53
      %p65 = scmp.eq.s32.totalorder %s22, 1
      %p66 = por %p64, %p65
      %p68 = scmp.ne.s32.totalorder %s53, %s67
      %p69 = scmp.eq.s32.totalorder %s22, 0
      %p70 = por %p68, %p69
      %s72 = sadd.s32 %s71, 1
      %p75 = scmp.eq.s32.totalorder %s16, 1
      %p76 = scmp.ne.s32.totalorder %s71, %s73
      %p77 = scmp.eq.s32.totalorder %s16, 0
      %p78 = por %p76, %p77
      %p79 = scmp.ne.s32.totalorder %s71, %s73
      %p80 = scmp.eq.s32.totalorder %s21, 1
      %p81 = por %p79, %p80
      %p82 = scmp.ne.s32.totalorder %s73, %s74
      %p83 = scmp.eq.s32.totalorder %s21, 0
      %p84 = por %p82, %p83
      %p85 = scmp.ne.s32.totalorder %s73, %s74
      %p86 = scmp.eq.s32.totalorder %s22, 1
      %p87 = por %p85, %p86
      %p89 = scmp.ne.s32.totalorder %s74, %s88
      %p90 = scmp.eq.s32.totalorder %s22, 0
      %p91 = por %p89, %p90
      %s92 = ssub.s32 %s16, %s23
      %p93 = scmp.eq.s32.totalorder %s92, 0
      %s95 = sadd.s32 %s94, 1
      %s96 = scalar_select %p93, %s94, %s95
      %p99 = pneg %p93
      %p100 = scmp.eq.s32.totalorder %s16, 1
      %p101 = por %p99, %p100
      %p102 = scmp.ne.s32.totalorder %s94, %s97
      %p103 = scmp.eq.s32.totalorder %s16, 0
      %p104 = por %p102, %p103
      %p105 = scmp.ne.s32.totalorder %s94, %s97
      %p106 = scmp.eq.s32.totalorder %s21, 1
      %p107 = por %p105, %p106
      %p108 = scmp.ne.s32.totalorder %s97, %s98
      %p109 = scmp.eq.s32.totalorder %s21, 0
      %p110 = por %p108, %p109
      %p111 = scmp.ne.s32.totalorder %s97, %s98
      %p112 = scmp.eq.s32.totalorder %s22, 1
      %p113 = por %p111, %p112
      %p115 = scmp.ne.s32.totalorder %s98, %s114
      %p116 = scmp.eq.s32.totalorder %s22, 0
      %p117 = por %p115, %p116
      %p118 = scmp.le.s32.totalorder 1, %s16
      %p119 = scmp.lt.s32.totalorder %s16, 3
      %p120 = pnand %p118, %p119
      %p121 = pneg %p120
      // Predicated region
      $region9: #{tpu_custom_call.1} parent=5 // pred_check
        _
      $region10: #{tpu_custom_call.1} parent=5 // pred_check_branch
        %123 = sbr.rel (%p120) target = $region12
      $region11: #{tpu_custom_call.1} parent=5 // pred_region
        %s124 = ssub.s32 %s16, 1
        // Predicated region
        $region13: #{tpu_custom_call.1} parent=11 // pred_check
          %p125 = pneg %p63
        $region14: #{tpu_custom_call.1} parent=11 // pred_check_branch
          %127 = sbr.rel (%p125) target = $region16
        $region15: #{tpu_custom_call.1} parent=11 // pred_region
          %s129 = ssub.s32 16384, 16384
          %130 = vsyncadd [#allocation6], %s129
          %s131 = sshll.u32 [#allocation5], 4
          %s132 = int_to_ptr.vmem [resolvable:$true] %s131
          %137 = dma.hbm_to_vmem [thread:$0]  %s1, 16384, %s132, [#allocation6], 256, 256, 16
        $region16: #{tpu_custom_call.1} parent=11 // pred_fallthru
          _
        // Predicated region
        $region17: #{tpu_custom_call.1} parent=11 // pred_check
          %p138 = pneg %p84
        $region18: #{tpu_custom_call.1} parent=11 // pred_check_branch
          %140 = sbr.rel (%p138) target = $region20
        $region19: #{tpu_custom_call.1} parent=11 // pred_region
          _
        $region20: #{tpu_custom_call.1} parent=11 // pred_fallthru
          _
      $region12: #{tpu_custom_call.1} parent=5 // pred_fallthru
        _
      %p141 = scmp.lt.s32.totalorder %s16, 2
      // Predicated region
      $region21: #{tpu_custom_call.1} parent=5 // pred_check
        %p142 = pneg %p141
      $region22: #{tpu_custom_call.1} parent=5 // pred_check_branch
        %144 = sbr.rel (%p142) target = $region24
      $region23: #{tpu_custom_call.1} parent=5 // pred_region
        // Predicated region
        $region25: #{tpu_custom_call.1} parent=23 // pred_check
          %p145 = pneg %p36
        $region26: #{tpu_custom_call.1} parent=23 // pred_check_branch
          %147 = sbr.rel (%p145) target = $region28
        $region27: #{tpu_custom_call.1} parent=23 // pred_region
          %s148 = sand.u32 %s26, 1
          %s149 = scalar_lea.sflag [#allocation3], %s148
          %s150 = sand.u32 %s26, 1
          %s151 = smul.addr %s150, 256
          %s152 = scalar_lea.vmem [#allocation2], %s151
          %s153 = smul.u32 16, %s16
          %s155 = ssub.s32 4096, 4096
          %156 = vsyncadd %s149, %s155
          %s157 = smul.addr %s153, 4
          %s158 = smul.addr %s157, 64
          %s159 = scalar_lea.hbm %s0, %s158
          %s160 = sshll.u32 %s152, 4
          %s161 = int_to_ptr.vmem [resolvable:$true] %s160
          %166 = dma.hbm_to_vmem [thread:$0]  %s159, 4096, %s161, %s149, 256, 256, 16
        $region28: #{tpu_custom_call.1} parent=23 // pred_fallthru
          _
      $region24: #{tpu_custom_call.1} parent=5 // pred_fallthru
        _
      %p167 = scmp.le.s32.totalorder 1, %s16
      %p168 = scmp.lt.s32.totalorder %s16, 3
      %p169 = pnand %p167, %p168
      %p170 = pneg %p169
      // Predicated region
      $region29: #{tpu_custom_call.1} parent=5 // pred_check
        _
      $region30: #{tpu_custom_call.1} parent=5 // pred_check_branch
        %172 = sbr.rel (%p169) target = $region32
      $region31: #{tpu_custom_call.1} parent=5 // pred_region
        %s173 = ssub.s32 %s16, 1
        %s174 = sand.u32 %s29, 1
        %s175 = scalar_lea.sflag [#allocation3], %s174
        %s176 = sand.u32 %s29, 1
        %s177 = smul.addr %s176, 256
        %s178 = scalar_lea.vmem [#allocation2], %s177
        // Predicated region
        $region33: #{tpu_custom_call.1} parent=31 // pred_check
          %p179 = pneg %p42
        $region34: #{tpu_custom_call.1} parent=31 // pred_check_branch
          %181 = sbr.rel (%p179) target = $region36
        $region35: #{tpu_custom_call.1} parent=31 // pred_region
          %182 = dma.done %s175, 4096
        $region36: #{tpu_custom_call.1} parent=31 // pred_fallthru
          _
        // Predicated region
        $region37: #{tpu_custom_call.1} parent=31 // pred_check
          %p183 = pneg %p63
        $region38: #{tpu_custom_call.1} parent=31 // pred_check_branch
          %185 = sbr.rel (%p183) target = $region40
        $region39: #{tpu_custom_call.1} parent=31 // pred_region
          %186 = dma.done [#allocation6], 16384
        $region40: #{tpu_custom_call.1} parent=31 // pred_fallthru
          _
        %s187 = sand.u32 %s29, 1
        %s188 = scalar_lea.sflag [#allocation3], %s187
        %s189 = sand.u32 %s29, 1
        %s190 = smul.addr %s189, 256
        %s191 = scalar_lea.vmem [#allocation2], %s190
        %p192 = pneg %p42
        %p193 = pneg %p39
        %p194 = pneg %p63
        %p195 = pneg %p60
        %p196 = pneg %p84
        %p197 = pneg %p81
        %p198 = pneg %p110
        %p199 = pneg %p107
        %s200 = sand.u32 %s97, 1
        %s201 = scalar_lea.sflag [#allocation4], %s200
        %s202 = sand.u32 %s97, 1
        %s203 = smul.addr %s202, 512
        %s204 = scalar_lea.vmem [#allocation7], %s203
        %s205 = smul.u32 16, %s21
        %s206 = smul.u32 16, %s21
        %v207 = vld [vmem:[%s178] sm:$0xff]
        %v208 = vld [vmem:[%s178 + $0x8] sm:$0xff]
        %v209 = vld [vmem:[%s178 + $0x10] sm:$0xff]
        %v210 = vld [vmem:[%s178 + $0x18] sm:$0xff]
        %v211 = vld [vmem:[%s178 + $0x20] sm:$0xff]
        %v212 = vld [vmem:[%s178 + $0x28] sm:$0xff]
        %v213 = vld [vmem:[%s178 + $0x30] sm:$0xff]
        %v214 = vld [vmem:[%s178 + $0x38] sm:$0xff]
        %v215 = vld [vmem:[%s178 + $0x40] sm:$0xff]
        %v216 = vld [vmem:[%s178 + $0x48] sm:$0xff]
        %v217 = vld [vmem:[%s178 + $0x50] sm:$0xff]
        %v218 = vld [vmem:[%s178 + $0x58] sm:$0xff]
        %v219 = vld [vmem:[%s178 + $0x60] sm:$0xff]
        %v220 = vld [vmem:[%s178 + $0x68] sm:$0xff]
        %v221 = vld [vmem:[%s178 + $0x70] sm:$0xff]
        %v222 = vld [vmem:[%s178 + $0x78] sm:$0xff]
        %v223 = vld [vmem:[%s178 + $0x80] sm:$0xff]
        %v224 = vld [vmem:[%s178 + $0x88] sm:$0xff]
        %v225 = vld [vmem:[%s178 + $0x90] sm:$0xff]
        %v226 = vld [vmem:[%s178 + $0x98] sm:$0xff]
        %v227 = vld [vmem:[%s178 + $0xa0] sm:$0xff]
        %v228 = vld [vmem:[%s178 + $0xa8] sm:$0xff]
        %v229 = vld [vmem:[%s178 + $0xb0] sm:$0xff]
        %v230 = vld [vmem:[%s178 + $0xb8] sm:$0xff]
        %v231 = vld [vmem:[%s178 + $0xc0] sm:$0xff]
        %v232 = vld [vmem:[%s178 + $0xc8] sm:$0xff]
        %v233 = vld [vmem:[%s178 + $0xd0] sm:$0xff]
        %v234 = vld [vmem:[%s178 + $0xd8] sm:$0xff]
        %v235 = vld [vmem:[%s178 + $0xe0] sm:$0xff]
        %v236 = vld [vmem:[%s178 + $0xe8] sm:$0xff]
        %v237 = vld [vmem:[%s178 + $0xf0] sm:$0xff]
        %v238 = vld [vmem:[%s178 + $0xf8] sm:$0xff]
        %v239 = vld [vmem:[#allocation5] sm:$0xff]
        %v240 = vld [vmem:[#allocation5 + $0x8] sm:$0xff]
        %v241 = vld [vmem:[#allocation5 + $0x10] sm:$0xff]
        %v242 = vld [vmem:[#allocation5 + $0x18] sm:$0xff]
        %v243 = vld [vmem:[#allocation5 + $0x20] sm:$0xff]
        %v244 = vld [vmem:[#allocation5 + $0x28] sm:$0xff]
        %v245 = vld [vmem:[#allocation5 + $0x30] sm:$0xff]
        %v246 = vld [vmem:[#allocation5 + $0x38] sm:$0xff]
        %v247 = vld [vmem:[#allocation5 + $0x40] sm:$0xff]
        %v248 = vld [vmem:[#allocation5 + $0x48] sm:$0xff]
        %v249 = vld [vmem:[#allocation5 + $0x50] sm:$0xff]
        %v250 = vld [vmem:[#allocation5 + $0x58] sm:$0xff]
        %v251 = vld [vmem:[#allocation5 + $0x60] sm:$0xff]
        %v252 = vld [vmem:[#allocation5 + $0x68] sm:$0xff]
        %v253 = vld [vmem:[#allocation5 + $0x70] sm:$0xff]
        %v254 = vld [vmem:[#allocation5 + $0x78] sm:$0xff]
        %v255 = vld [vmem:[#allocation5 + $0x80] sm:$0xff]
        %v256 = vld [vmem:[#allocation5 + $0x88] sm:$0xff]
        %v257 = vld [vmem:[#allocation5 + $0x90] sm:$0xff]
        %v258 = vld [vmem:[#allocation5 + $0x98] sm:$0xff]
        %v259 = vld [vmem:[#allocation5 + $0xa0] sm:$0xff]
        %v260 = vld [vmem:[#allocation5 + $0xa8] sm:$0xff]
        %v261 = vld [vmem:[#allocation5 + $0xb0] sm:$0xff]
        %v262 = vld [vmem:[#allocation5 + $0xb8] sm:$0xff]
        %v263 = vld [vmem:[#allocation5 + $0xc0] sm:$0xff]
        %v264 = vld [vmem:[#allocation5 + $0xc8] sm:$0xff]
        %v265 = vld [vmem:[#allocation5 + $0xd0] sm:$0xff]
        %v266 = vld [vmem:[#allocation5 + $0xd8] sm:$0xff]
        %v267 = vld [vmem:[#allocation5 + $0xe0] sm:$0xff]
        %v268 = vld [vmem:[#allocation5 + $0xe8] sm:$0xff]
        %v269 = vld [vmem:[#allocation5 + $0xf0] sm:$0xff]
        %v270 = vld [vmem:[#allocation5 + $0xf8] sm:$0xff]
        %v271 = vld [vmem:[#allocation5 + $0x100] sm:$0xff]
        %v272 = vld [vmem:[#allocation5 + $0x108] sm:$0xff]
        %v273 = vld [vmem:[#allocation5 + $0x110] sm:$0xff]
        %v274 = vld [vmem:[#allocation5 + $0x118] sm:$0xff]
        %v275 = vld [vmem:[#allocation5 + $0x120] sm:$0xff]
        %v276 = vld [vmem:[#allocation5 + $0x128] sm:$0xff]
        %v277 = vld [vmem:[#allocation5 + $0x130] sm:$0xff]
        %v278 = vld [vmem:[#allocation5 + $0x138] sm:$0xff]
        %v279 = vld [vmem:[#allocation5 + $0x140] sm:$0xff]
        %v280 = vld [vmem:[#allocation5 + $0x148] sm:$0xff]
        %v281 = vld [vmem:[#allocation5 + $0x150] sm:$0xff]
        %v282 = vld [vmem:[#allocation5 + $0x158] sm:$0xff]
        %v283 = vld [vmem:[#allocation5 + $0x160] sm:$0xff]
        %v284 = vld [vmem:[#allocation5 + $0x168] sm:$0xff]
        %v285 = vld [vmem:[#allocation5 + $0x170] sm:$0xff]
        %v286 = vld [vmem:[#allocation5 + $0x178] sm:$0xff]
        %v287 = vld [vmem:[#allocation5 + $0x180] sm:$0xff]
        %v288 = vld [vmem:[#allocation5 + $0x188] sm:$0xff]
        %v289 = vld [vmem:[#allocation5 + $0x190] sm:$0xff]
        %v290 = vld [vmem:[#allocation5 + $0x198] sm:$0xff]
        %v291 = vld [vmem:[#allocation5 + $0x1a0] sm:$0xff]
        %v292 = vld [vmem:[#allocation5 + $0x1a8] sm:$0xff]
        %v293 = vld [vmem:[#allocation5 + $0x1b0] sm:$0xff]
        %v294 = vld [vmem:[#allocation5 + $0x1b8] sm:$0xff]
        %v295 = vld [vmem:[#allocation5 + $0x1c0] sm:$0xff]
        %v296 = vld [vmem:[#allocation5 + $0x1c8] sm:$0xff]
        %v297 = vld [vmem:[#allocation5 + $0x1d0] sm:$0xff]
        %v298 = vld [vmem:[#allocation5 + $0x1d8] sm:$0xff]
        %v299 = vld [vmem:[#allocation5 + $0x1e0] sm:$0xff]
        %v300 = vld [vmem:[#allocation5 + $0x1e8] sm:$0xff]
        %v301 = vld [vmem:[#allocation5 + $0x1f0] sm:$0xff]
        %v302 = vld [vmem:[#allocation5 + $0x1f8] sm:$0xff]
        %v303 = vld [vmem:[#allocation5 + $0x200] sm:$0xff]
        %v304 = vld [vmem:[#allocation5 + $0x208] sm:$0xff]
        %v305 = vld [vmem:[#allocation5 + $0x210] sm:$0xff]
        %v306 = vld [vmem:[#allocation5 + $0x218] sm:$0xff]
        %v307 = vld [vmem:[#allocation5 + $0x220] sm:$0xff]
        %v308 = vld [vmem:[#allocation5 + $0x228] sm:$0xff]
        %v309 = vld [vmem:[#allocation5 + $0x230] sm:$0xff]
        %v310 = vld [vmem:[#allocation5 + $0x238] sm:$0xff]
        %v311 = vld [vmem:[#allocation5 + $0x240] sm:$0xff]
        %v312 = vld [vmem:[#allocation5 + $0x248] sm:$0xff]
        %v313 = vld [vmem:[#allocation5 + $0x250] sm:$0xff]
        %v314 = vld [vmem:[#allocation5 + $0x258] sm:$0xff]
        %v315 = vld [vmem:[#allocation5 + $0x260] sm:$0xff]
        %v316 = vld [vmem:[#allocation5 + $0x268] sm:$0xff]
        %v317 = vld [vmem:[#allocation5 + $0x270] sm:$0xff]
        %v318 = vld [vmem:[#allocation5 + $0x278] sm:$0xff]
        %v319 = vld [vmem:[#allocation5 + $0x280] sm:$0xff]
        %v320 = vld [vmem:[#allocation5 + $0x288] sm:$0xff]
        %v321 = vld [vmem:[#allocation5 + $0x290] sm:$0xff]
        %v322 = vld [vmem:[#allocation5 + $0x298] sm:$0xff]
        %v323 = vld [vmem:[#allocation5 + $0x2a0] sm:$0xff]
        %v324 = vld [vmem:[#allocation5 + $0x2a8] sm:$0xff]
        %v325 = vld [vmem:[#allocation5 + $0x2b0] sm:$0xff]
        %v326 = vld [vmem:[#allocation5 + $0x2b8] sm:$0xff]
        %v327 = vld [vmem:[#allocation5 + $0x2c0] sm:$0xff]
        %v328 = vld [vmem:[#allocation5 + $0x2c8] sm:$0xff]
        %v329 = vld [vmem:[#allocation5 + $0x2d0] sm:$0xff]
        %v330 = vld [vmem:[#allocation5 + $0x2d8] sm:$0xff]
        %v331 = vld [vmem:[#allocation5 + $0x2e0] sm:$0xff]
        %v332 = vld [vmem:[#allocation5 + $0x2e8] sm:$0xff]
        %v333 = vld [vmem:[#allocation5 + $0x2f0] sm:$0xff]
        %v334 = vld [vmem:[#allocation5 + $0x2f8] sm:$0xff]
        %v335 = vld [vmem:[#allocation5 + $0x300] sm:$0xff]
        %v336 = vld [vmem:[#allocation5 + $0x308] sm:$0xff]
        %v337 = vld [vmem:[#allocation5 + $0x310] sm:$0xff]
        %v338 = vld [vmem:[#allocation5 + $0x318] sm:$0xff]
        %v339 = vld [vmem:[#allocation5 + $0x320] sm:$0xff]
        %v340 = vld [vmem:[#allocation5 + $0x328] sm:$0xff]
        %v341 = vld [vmem:[#allocation5 + $0x330] sm:$0xff]
        %v342 = vld [vmem:[#allocation5 + $0x338] sm:$0xff]
        %v343 = vld [vmem:[#allocation5 + $0x340] sm:$0xff]
        %v344 = vld [vmem:[#allocation5 + $0x348] sm:$0xff]
        %v345 = vld [vmem:[#allocation5 + $0x350] sm:$0xff]
        %v346 = vld [vmem:[#allocation5 + $0x358] sm:$0xff]
        %v347 = vld [vmem:[#allocation5 + $0x360] sm:$0xff]
        %v348 = vld [vmem:[#allocation5 + $0x368] sm:$0xff]
        %v349 = vld [vmem:[#allocation5 + $0x370] sm:$0xff]
        %v350 = vld [vmem:[#allocation5 + $0x378] sm:$0xff]
        %v351 = vld [vmem:[#allocation5 + $0x380] sm:$0xff]
        %v352 = vld [vmem:[#allocation5 + $0x388] sm:$0xff]
        %v353 = vld [vmem:[#allocation5 + $0x390] sm:$0xff]
        %v354 = vld [vmem:[#allocation5 + $0x398] sm:$0xff]
        %v355 = vld [vmem:[#allocation5 + $0x3a0] sm:$0xff]
        %v356 = vld [vmem:[#allocation5 + $0x3a8] sm:$0xff]
        %v357 = vld [vmem:[#allocation5 + $0x3b0] sm:$0xff]
        %v358 = vld [vmem:[#allocation5 + $0x3b8] sm:$0xff]
        %v359 = vld [vmem:[#allocation5 + $0x3c0] sm:$0xff]
        %v360 = vld [vmem:[#allocation5 + $0x3c8] sm:$0xff]
        %v361 = vld [vmem:[#allocation5 + $0x3d0] sm:$0xff]
        %v362 = vld [vmem:[#allocation5 + $0x3d8] sm:$0xff]
        %v363 = vld [vmem:[#allocation5 + $0x3e0] sm:$0xff]
        %v364 = vld [vmem:[#allocation5 + $0x3e8] sm:$0xff]
        %v365 = vld [vmem:[#allocation5 + $0x3f0] sm:$0xff]
        %v366 = vld [vmem:[#allocation5 + $0x3f8] sm:$0xff]
        %v367 = vld [vmem:[%s2] sm:$0xf]
        %v369 = vlaneseq
        %v370 = vshrl.u32 %v369, 7
        %v371 = vsub.s32 0, %v370
        %v372 = vrot.slane %v367, %v371
        %v373 = vlaneseq
        %v374 = vshrl.u32 %v373, 7
        %v375 = vsub.s32 1, %v374
        %v376 = vrot.slane %v367, %v375
        %v377 = vlaneseq
        %v378 = vshrl.u32 %v377, 7
        %v379 = vsub.s32 2, %v378
        %v380 = vrot.slane %v367, %v379
        %v381 = vlaneseq
        %v382 = vshrl.u32 %v381, 7
        %v383 = vsub.s32 3, %v382
        %v384 = vrot.slane %v367, %v383
        %v421 = vunpack.c.l.b16 %v207
        %v422 = vunpack.c.h.b16 %v207
        %v423 = vunpack.c.l.b16 %v208
        %v424 = vunpack.c.h.b16 %v208
        %v425 = vunpack.c.l.b16 %v209
        %v426 = vunpack.c.h.b16 %v209
        %v427 = vunpack.c.l.b16 %v210
        %v428 = vunpack.c.h.b16 %v210
        %v429 = vunpack.c.l.b16 %v211
        %v430 = vunpack.c.h.b16 %v211
        %v431 = vunpack.c.l.b16 %v212
        %v432 = vunpack.c.h.b16 %v212
        %v433 = vunpack.c.l.b16 %v213
        %v434 = vunpack.c.h.b16 %v213
        %v435 = vunpack.c.l.b16 %v214
        %v436 = vunpack.c.h.b16 %v214
        %v437 = vunpack.c.l.b16 %v215
        %v438 = vunpack.c.h.b16 %v215
        %v439 = vunpack.c.l.b16 %v216
        %v440 = vunpack.c.h.b16 %v216
        %v441 = vunpack.c.l.b16 %v217
        %v442 = vunpack.c.h.b16 %v217
        %v443 = vunpack.c.l.b16 %v218
        %v444 = vunpack.c.h.b16 %v218
        %v445 = vunpack.c.l.b16 %v219
        %v446 = vunpack.c.h.b16 %v219
        %v447 = vunpack.c.l.b16 %v220
        %v448 = vunpack.c.h.b16 %v220
        %v449 = vunpack.c.l.b16 %v221
        %v450 = vunpack.c.h.b16 %v221
        %v451 = vunpack.c.l.b16 %v222
        %v452 = vunpack.c.h.b16 %v222
        %v453 = vunpack.c.l.b16 %v223
        %v454 = vunpack.c.h.b16 %v223
        %v455 = vunpack.c.l.b16 %v224
        %v456 = vunpack.c.h.b16 %v224
        %v457 = vunpack.c.l.b16 %v225
        %v458 = vunpack.c.h.b16 %v225
        %v459 = vunpack.c.l.b16 %v226
        %v460 = vunpack.c.h.b16 %v226
        %v461 = vunpack.c.l.b16 %v227
        %v462 = vunpack.c.h.b16 %v227
        %v463 = vunpack.c.l.b16 %v228
        %v464 = vunpack.c.h.b16 %v228
        %v465 = vunpack.c.l.b16 %v229
        %v466 = vunpack.c.h.b16 %v229
        %v467 = vunpack.c.l.b16 %v230
        %v468 = vunpack.c.h.b16 %v230
        %v469 = vunpack.c.l.b16 %v231
        %v470 = vunpack.c.h.b16 %v231
        %v471 = vunpack.c.l.b16 %v232
        %v472 = vunpack.c.h.b16 %v232
        %v473 = vunpack.c.l.b16 %v233
        %v474 = vunpack.c.h.b16 %v233
        %v475 = vunpack.c.l.b16 %v234
        %v476 = vunpack.c.h.b16 %v234
        %v477 = vunpack.c.l.b16 %v235
        %v478 = vunpack.c.h.b16 %v235
        %v479 = vunpack.c.l.b16 %v236
        %v480 = vunpack.c.h.b16 %v236
        %v481 = vunpack.c.l.b16 %v237
        %v482 = vunpack.c.h.b16 %v237
        %v483 = vunpack.c.l.b16 %v238
        %v484 = vunpack.c.h.b16 %v238
        %v485 = vpack.c.b16 %v425, %v421
        %v486 = vpack.c.b16 %v426, %v422
        %v487 = vpack.c.b16 %v427, %v423
        %v488 = vpack.c.b16 %v428, %v424
        %v489 = vpack.c.b16 %v433, %v429
        %v490 = vpack.c.b16 %v434, %v430
        %v491 = vpack.c.b16 %v435, %v431
        %v492 = vpack.c.b16 %v436, %v432
        %v493 = vpack.c.b16 %v441, %v437
        %v494 = vpack.c.b16 %v442, %v438
        %v495 = vpack.c.b16 %v443, %v439
        %v496 = vpack.c.b16 %v444, %v440
        %v497 = vpack.c.b16 %v449, %v445
        %v498 = vpack.c.b16 %v450, %v446
        %v499 = vpack.c.b16 %v451, %v447
        %v500 = vpack.c.b16 %v452, %v448
        %v501 = vpack.c.b16 %v457, %v453
        %v502 = vpack.c.b16 %v458, %v454
        %v503 = vpack.c.b16 %v459, %v455
        %v504 = vpack.c.b16 %v460, %v456
        %v505 = vpack.c.b16 %v465, %v461
        %v506 = vpack.c.b16 %v466, %v462
        %v507 = vpack.c.b16 %v467, %v463
        %v508 = vpack.c.b16 %v468, %v464
        %v509 = vpack.c.b16 %v473, %v469
        %v510 = vpack.c.b16 %v474, %v470
        %v511 = vpack.c.b16 %v475, %v471
        %v512 = vpack.c.b16 %v476, %v472
        %v513 = vpack.c.b16 %v481, %v477
        %v514 = vpack.c.b16 %v482, %v478
        %v515 = vpack.c.b16 %v483, %v479
        %v516 = vpack.c.b16 %v484, %v480
        %v677 = vunpack.c.l.b16 %v239
        %v678 = vunpack.c.h.b16 %v239
        %v679 = vunpack.c.l.b16 %v240
        %v680 = vunpack.c.h.b16 %v240
        %v681 = vunpack.c.l.b16 %v241
        %v682 = vunpack.c.h.b16 %v241
        %v683 = vunpack.c.l.b16 %v242
        %v684 = vunpack.c.h.b16 %v242
        %v685 = vunpack.c.l.b16 %v243
        %v686 = vunpack.c.h.b16 %v243
        %v687 = vunpack.c.l.b16 %v244
        %v688 = vunpack.c.h.b16 %v244
        %v689 = vunpack.c.l.b16 %v245
        %v690 = vunpack.c.h.b16 %v245
        %v691 = vunpack.c.l.b16 %v246
        %v692 = vunpack.c.h.b16 %v246
        %v693 = vunpack.c.l.b16 %v247
        %v694 = vunpack.c.h.b16 %v247
        %v695 = vunpack.c.l.b16 %v248
        %v696 = vunpack.c.h.b16 %v248
        %v697 = vunpack.c.l.b16 %v249
        %v698 = vunpack.c.h.b16 %v249
        %v699 = vunpack.c.l.b16 %v250
        %v700 = vunpack.c.h.b16 %v250
        %v701 = vunpack.c.l.b16 %v251
        %v702 = vunpack.c.h.b16 %v251
        %v703 = vunpack.c.l.b16 %v252
        %v704 = vunpack.c.h.b16 %v252
        %v705 = vunpack.c.l.b16 %v253
        %v706 = vunpack.c.h.b16 %v253
        %v707 = vunpack.c.l.b16 %v254
        %v708 = vunpack.c.h.b16 %v254
        %v709 = vunpack.c.l.b16 %v255
        %v710 = vunpack.c.h.b16 %v255
        %v711 = vunpack.c.l.b16 %v256
        %v712 = vunpack.c.h.b16 %v256
        %v713 = vunpack.c.l.b16 %v257
        %v714 = vunpack.c.h.b16 %v257
        %v715 = vunpack.c.l.b16 %v258
        %v716 = vunpack.c.h.b16 %v258
        %v717 = vunpack.c.l.b16 %v259
        %v718 = vunpack.c.h.b16 %v259
        %v719 = vunpack.c.l.b16 %v260
        %v720 = vunpack.c.h.b16 %v260
        %v721 = vunpack.c.l.b16 %v261
        %v722 = vunpack.c.h.b16 %v261
        %v723 = vunpack.c.l.b16 %v262
        %v724 = vunpack.c.h.b16 %v262
        %v725 = vunpack.c.l.b16 %v263
        %v726 = vunpack.c.h.b16 %v263
        %v727 = vunpack.c.l.b16 %v264
        %v728 = vunpack.c.h.b16 %v264
        %v729 = vunpack.c.l.b16 %v265
        %v730 = vunpack.c.h.b16 %v265
        %v731 = vunpack.c.l.b16 %v266
        %v732 = vunpack.c.h.b16 %v266
        %v733 = vunpack.c.l.b16 %v267
        %v734 = vunpack.c.h.b16 %v267
        %v735 = vunpack.c.l.b16 %v268
        %v736 = vunpack.c.h.b16 %v268
        %v737 = vunpack.c.l.b16 %v269
        %v738 = vunpack.c.h.b16 %v269
        %v739 = vunpack.c.l.b16 %v270
        %v740 = vunpack.c.h.b16 %v270
        %v741 = vunpack.c.l.b16 %v271
        %v742 = vunpack.c.h.b16 %v271
        %v743 = vunpack.c.l.b16 %v272
        %v744 = vunpack.c.h.b16 %v272
        %v745 = vunpack.c.l.b16 %v273
        %v746 = vunpack.c.h.b16 %v273
        %v747 = vunpack.c.l.b16 %v274
        %v748 = vunpack.c.h.b16 %v274
        %v749 = vunpack.c.l.b16 %v275
        %v750 = vunpack.c.h.b16 %v275
        %v751 = vunpack.c.l.b16 %v276
        %v752 = vunpack.c.h.b16 %v276
        %v753 = vunpack.c.l.b16 %v277
        %v754 = vunpack.c.h.b16 %v277
        %v755 = vunpack.c.l.b16 %v278
        %v756 = vunpack.c.h.b16 %v278
        %v757 = vunpack.c.l.b16 %v279
        %v758 = vunpack.c.h.b16 %v279
        %v759 = vunpack.c.l.b16 %v280
        %v760 = vunpack.c.h.b16 %v280
        %v761 = vunpack.c.l.b16 %v281
        %v762 = vunpack.c.h.b16 %v281
        %v763 = vunpack.c.l.b16 %v282
        %v764 = vunpack.c.h.b16 %v282
        %v765 = vunpack.c.l.b16 %v283
        %v766 = vunpack.c.h.b16 %v283
        %v767 = vunpack.c.l.b16 %v284
        %v768 = vunpack.c.h.b16 %v284
        %v769 = vunpack.c.l.b16 %v285
        %v770 = vunpack.c.h.b16 %v285
        %v771 = vunpack.c.l.b16 %v286
        %v772 = vunpack.c.h.b16 %v286
        %v773 = vunpack.c.l.b16 %v287
        %v774 = vunpack.c.h.b16 %v287
        %v775 = vunpack.c.l.b16 %v288
        %v776 = vunpack.c.h.b16 %v288
        %v777 = vunpack.c.l.b16 %v289
        %v778 = vunpack.c.h.b16 %v289
        %v779 = vunpack.c.l.b16 %v290
        %v780 = vunpack.c.h.b16 %v290
        %v781 = vunpack.c.l.b16 %v291
        %v782 = vunpack.c.h.b16 %v291
        %v783 = vunpack.c.l.b16 %v292
        %v784 = vunpack.c.h.b16 %v292
        %v785 = vunpack.c.l.b16 %v293
        %v786 = vunpack.c.h.b16 %v293
        %v787 = vunpack.c.l.b16 %v294
        %v788 = vunpack.c.h.b16 %v294
        %v789 = vunpack.c.l.b16 %v295
        %v790 = vunpack.c.h.b16 %v295
        %v791 = vunpack.c.l.b16 %v296
        %v792 = vunpack.c.h.b16 %v296
        %v793 = vunpack.c.l.b16 %v297
        %v794 = vunpack.c.h.b16 %v297
        %v795 = vunpack.c.l.b16 %v298
        %v796 = vunpack.c.h.b16 %v298
        %v797 = vunpack.c.l.b16 %v299
        %v798 = vunpack.c.h.b16 %v299
        %v799 = vunpack.c.l.b16 %v300
        %v800 = vunpack.c.h.b16 %v300
        %v801 = vunpack.c.l.b16 %v301
        %v802 = vunpack.c.h.b16 %v301
        %v803 = vunpack.c.l.b16 %v302
        %v804 = vunpack.c.h.b16 %v302
        %v805 = vunpack.c.l.b16 %v303
        %v806 = vunpack.c.h.b16 %v303
        %v807 = vunpack.c.l.b16 %v304
        %v808 = vunpack.c.h.b16 %v304
        %v809 = vunpack.c.l.b16 %v305
        %v810 = vunpack.c.h.b16 %v305
        %v811 = vunpack.c.l.b16 %v306
        %v812 = vunpack.c.h.b16 %v306
        %v813 = vunpack.c.l.b16 %v307
        %v814 = vunpack.c.h.b16 %v307
        %v815 = vunpack.c.l.b16 %v308
        %v816 = vunpack.c.h.b16 %v308
        %v817 = vunpack.c.l.b16 %v309
        %v818 = vunpack.c.h.b16 %v309
        %v819 = vunpack.c.l.b16 %v310
        %v820 = vunpack.c.h.b16 %v310
        %v821 = vunpack.c.l.b16 %v311
        %v822 = vunpack.c.h.b16 %v311
        %v823 = vunpack.c.l.b16 %v312
        %v824 = vunpack.c.h.b16 %v312
        %v825 = vunpack.c.l.b16 %v313
        %v826 = vunpack.c.h.b16 %v313
        %v827 = vunpack.c.l.b16 %v314
        %v828 = vunpack.c.h.b16 %v314
        %v829 = vunpack.c.l.b16 %v315
        %v830 = vunpack.c.h.b16 %v315
        %v831 = vunpack.c.l.b16 %v316
        %v832 = vunpack.c.h.b16 %v316
        %v833 = vunpack.c.l.b16 %v317
        %v834 = vunpack.c.h.b16 %v317
        %v835 = vunpack.c.l.b16 %v318
        %v836 = vunpack.c.h.b16 %v318
        %v837 = vunpack.c.l.b16 %v319
        %v838 = vunpack.c.h.b16 %v319
        %v839 = vunpack.c.l.b16 %v320
        %v840 = vunpack.c.h.b16 %v320
        %v841 = vunpack.c.l.b16 %v321
        %v842 = vunpack.c.h.b16 %v321
        %v843 = vunpack.c.l.b16 %v322
        %v844 = vunpack.c.h.b16 %v322
        %v845 = vunpack.c.l.b16 %v323
        %v846 = vunpack.c.h.b16 %v323
        %v847 = vunpack.c.l.b16 %v324
        %v848 = vunpack.c.h.b16 %v324
        %v849 = vunpack.c.l.b16 %v325
        %v850 = vunpack.c.h.b16 %v325
        %v851 = vunpack.c.l.b16 %v326
        %v852 = vunpack.c.h.b16 %v326
        %v853 = vunpack.c.l.b16 %v327
        %v854 = vunpack.c.h.b16 %v327
        %v855 = vunpack.c.l.b16 %v328
        %v856 = vunpack.c.h.b16 %v328
        %v857 = vunpack.c.l.b16 %v329
        %v858 = vunpack.c.h.b16 %v329
        %v859 = vunpack.c.l.b16 %v330
        %v860 = vunpack.c.h.b16 %v330
        %v861 = vunpack.c.l.b16 %v331
        %v862 = vunpack.c.h.b16 %v331
        %v863 = vunpack.c.l.b16 %v332
        %v864 = vunpack.c.h.b16 %v332
        %v865 = vunpack.c.l.b16 %v333
        %v866 = vunpack.c.h.b16 %v333
        %v867 = vunpack.c.l.b16 %v334
        %v868 = vunpack.c.h.b16 %v334
        %v869 = vunpack.c.l.b16 %v335
        %v870 = vunpack.c.h.b16 %v335
        %v871 = vunpack.c.l.b16 %v336
        %v872 = vunpack.c.h.b16 %v336
        %v873 = vunpack.c.l.b16 %v337
        %v874 = vunpack.c.h.b16 %v337
        %v875 = vunpack.c.l.b16 %v338
        %v876 = vunpack.c.h.b16 %v338
        %v877 = vunpack.c.l.b16 %v339
        %v878 = vunpack.c.h.b16 %v339
        %v879 = vunpack.c.l.b16 %v340
        %v880 = vunpack.c.h.b16 %v340
        %v881 = vunpack.c.l.b16 %v341
        %v882 = vunpack.c.h.b16 %v341
        %v883 = vunpack.c.l.b16 %v342
        %v884 = vunpack.c.h.b16 %v342
        %v885 = vunpack.c.l.b16 %v343
        %v886 = vunpack.c.h.b16 %v343
        %v887 = vunpack.c.l.b16 %v344
        %v888 = vunpack.c.h.b16 %v344
        %v889 = vunpack.c.l.b16 %v345
        %v890 = vunpack.c.h.b16 %v345
        %v891 = vunpack.c.l.b16 %v346
        %v892 = vunpack.c.h.b16 %v346
        %v893 = vunpack.c.l.b16 %v347
        %v894 = vunpack.c.h.b16 %v347
        %v895 = vunpack.c.l.b16 %v348
        %v896 = vunpack.c.h.b16 %v348
        %v897 = vunpack.c.l.b16 %v349
        %v898 = vunpack.c.h.b16 %v349
        %v899 = vunpack.c.l.b16 %v350
        %v900 = vunpack.c.h.b16 %v350
        %v901 = vunpack.c.l.b16 %v351
        %v902 = vunpack.c.h.b16 %v351
        %v903 = vunpack.c.l.b16 %v352
        %v904 = vunpack.c.h.b16 %v352
        %v905 = vunpack.c.l.b16 %v353
        %v906 = vunpack.c.h.b16 %v353
        %v907 = vunpack.c.l.b16 %v354
        %v908 = vunpack.c.h.b16 %v354
        %v909 = vunpack.c.l.b16 %v355
        %v910 = vunpack.c.h.b16 %v355
        %v911 = vunpack.c.l.b16 %v356
        %v912 = vunpack.c.h.b16 %v356
        %v913 = vunpack.c.l.b16 %v357
        %v914 = vunpack.c.h.b16 %v357
        %v915 = vunpack.c.l.b16 %v358
        %v916 = vunpack.c.h.b16 %v358
        %v917 = vunpack.c.l.b16 %v359
        %v918 = vunpack.c.h.b16 %v359
        %v919 = vunpack.c.l.b16 %v360
        %v920 = vunpack.c.h.b16 %v360
        %v921 = vunpack.c.l.b16 %v361
        %v922 = vunpack.c.h.b16 %v361
        %v923 = vunpack.c.l.b16 %v362
        %v924 = vunpack.c.h.b16 %v362
        %v925 = vunpack.c.l.b16 %v363
        %v926 = vunpack.c.h.b16 %v363
        %v927 = vunpack.c.l.b16 %v364
        %v928 = vunpack.c.h.b16 %v364
        %v929 = vunpack.c.l.b16 %v365
        %v930 = vunpack.c.h.b16 %v365
        %v931 = vunpack.c.l.b16 %v366
        %v932 = vunpack.c.h.b16 %v366
        %v933 = vpack.c.b16 %v681, %v677
        %v934 = vpack.c.b16 %v682, %v678
        %v935 = vpack.c.b16 %v683, %v679
        %v936 = vpack.c.b16 %v684, %v680
        %v937 = vpack.c.b16 %v689, %v685
        %v938 = vpack.c.b16 %v690, %v686
        %v939 = vpack.c.b16 %v691, %v687
        %v940 = vpack.c.b16 %v692, %v688
        %v941 = vpack.c.b16 %v697, %v693
        %v942 = vpack.c.b16 %v698, %v694
        %v943 = vpack.c.b16 %v699, %v695
        %v944 = vpack.c.b16 %v700, %v696
        %v945 = vpack.c.b16 %v705, %v701
        %v946 = vpack.c.b16 %v706, %v702
        %v947 = vpack.c.b16 %v707, %v703
        %v948 = vpack.c.b16 %v708, %v704
        %v949 = vpack.c.b16 %v713, %v709
        %v950 = vpack.c.b16 %v714, %v710
        %v951 = vpack.c.b16 %v715, %v711
        %v952 = vpack.c.b16 %v716, %v712
        %v953 = vpack.c.b16 %v721, %v717
        %v954 = vpack.c.b16 %v722, %v718
        %v955 = vpack.c.b16 %v723, %v719
        %v956 = vpack.c.b16 %v724, %v720
        %v957 = vpack.c.b16 %v729, %v725
        %v958 = vpack.c.b16 %v730, %v726
        %v959 = vpack.c.b16 %v731, %v727
        %v960 = vpack.c.b16 %v732, %v728
        %v961 = vpack.c.b16 %v737, %v733
        %v962 = vpack.c.b16 %v738, %v734
        %v963 = vpack.c.b16 %v739, %v735
        %v964 = vpack.c.b16 %v740, %v736
        %v965 = vpack.c.b16 %v745, %v741
        %v966 = vpack.c.b16 %v746, %v742
        %v967 = vpack.c.b16 %v747, %v743
        %v968 = vpack.c.b16 %v748, %v744
        %v969 = vpack.c.b16 %v753, %v749
        %v970 = vpack.c.b16 %v754, %v750
        %v971 = vpack.c.b16 %v755, %v751
        %v972 = vpack.c.b16 %v756, %v752
        %v973 = vpack.c.b16 %v761, %v757
        %v974 = vpack.c.b16 %v762, %v758
        %v975 = vpack.c.b16 %v763, %v759
        %v976 = vpack.c.b16 %v764, %v760
        %v977 = vpack.c.b16 %v769, %v765
        %v978 = vpack.c.b16 %v770, %v766
        %v979 = vpack.c.b16 %v771, %v767
        %v980 = vpack.c.b16 %v772, %v768
        %v981 = vpack.c.b16 %v777, %v773
        %v982 = vpack.c.b16 %v778, %v774
        %v983 = vpack.c.b16 %v779, %v775
        %v984 = vpack.c.b16 %v780, %v776
        %v985 = vpack.c.b16 %v785, %v781
        %v986 = vpack.c.b16 %v786, %v782
        %v987 = vpack.c.b16 %v787, %v783
        %v988 = vpack.c.b16 %v788, %v784
        %v989 = vpack.c.b16 %v793, %v789
        %v990 = vpack.c.b16 %v794, %v790
        %v991 = vpack.c.b16 %v795, %v791
        %v992 = vpack.c.b16 %v796, %v792
        %v993 = vpack.c.b16 %v801, %v797
        %v994 = vpack.c.b16 %v802, %v798
        %v995 = vpack.c.b16 %v803, %v799
        %v996 = vpack.c.b16 %v804, %v800
        %v997 = vpack.c.b16 %v809, %v805
        %v998 = vpack.c.b16 %v810, %v806
        %v999 = vpack.c.b16 %v811, %v807
        %v1000 = vpack.c.b16 %v812, %v808
        %v1001 = vpack.c.b16 %v817, %v813
        %v1002 = vpack.c.b16 %v818, %v814
        %v1003 = vpack.c.b16 %v819, %v815
        %v1004 = vpack.c.b16 %v820, %v816
        %v1005 = vpack.c.b16 %v825, %v821
        %v1006 = vpack.c.b16 %v826, %v822
        %v1007 = vpack.c.b16 %v827, %v823
        %v1008 = vpack.c.b16 %v828, %v824
        %v1009 = vpack.c.b16 %v833, %v829
        %v1010 = vpack.c.b16 %v834, %v830
        %v1011 = vpack.c.b16 %v835, %v831
        %v1012 = vpack.c.b16 %v836, %v832
        %v1013 = vpack.c.b16 %v841, %v837
        %v1014 = vpack.c.b16 %v842, %v838
        %v1015 = vpack.c.b16 %v843, %v839
        %v1016 = vpack.c.b16 %v844, %v840
        %v1017 = vpack.c.b16 %v849, %v845
        %v1018 = vpack.c.b16 %v850, %v846
        %v1019 = vpack.c.b16 %v851, %v847
        %v1020 = vpack.c.b16 %v852, %v848
        %v1021 = vpack.c.b16 %v857, %v853
        %v1022 = vpack.c.b16 %v858, %v854
        %v1023 = vpack.c.b16 %v859, %v855
        %v1024 = vpack.c.b16 %v860, %v856
        %v1025 = vpack.c.b16 %v865, %v861
        %v1026 = vpack.c.b16 %v866, %v862
        %v1027 = vpack.c.b16 %v867, %v863
        %v1028 = vpack.c.b16 %v868, %v864
        %v1029 = vpack.c.b16 %v873, %v869
        %v1030 = vpack.c.b16 %v874, %v870
        %v1031 = vpack.c.b16 %v875, %v871
        %v1032 = vpack.c.b16 %v876, %v872
        %v1033 = vpack.c.b16 %v881, %v877
        %v1034 = vpack.c.b16 %v882, %v878
        %v1035 = vpack.c.b16 %v883, %v879
        %v1036 = vpack.c.b16 %v884, %v880
        %v1037 = vpack.c.b16 %v889, %v885
        %v1038 = vpack.c.b16 %v890, %v886
        %v1039 = vpack.c.b16 %v891, %v887
        %v1040 = vpack.c.b16 %v892, %v888
        %v1041 = vpack.c.b16 %v897, %v893
        %v1042 = vpack.c.b16 %v898, %v894
        %v1043 = vpack.c.b16 %v899, %v895
        %v1044 = vpack.c.b16 %v900, %v896
        %v1045 = vpack.c.b16 %v905, %v901
        %v1046 = vpack.c.b16 %v906, %v902
        %v1047 = vpack.c.b16 %v907, %v903
        %v1048 = vpack.c.b16 %v908, %v904
        %v1049 = vpack.c.b16 %v913, %v909
        %v1050 = vpack.c.b16 %v914, %v910
        %v1051 = vpack.c.b16 %v915, %v911
        %v1052 = vpack.c.b16 %v916, %v912
        %v1053 = vpack.c.b16 %v921, %v917
        %v1054 = vpack.c.b16 %v922, %v918
        %v1055 = vpack.c.b16 %v923, %v919
        %v1056 = vpack.c.b16 %v924, %v920
        %v1057 = vpack.c.b16 %v929, %v925
        %v1058 = vpack.c.b16 %v930, %v926
        %v1059 = vpack.c.b16 %v931, %v927
        %v1060 = vpack.c.b16 %v932, %v928
        %1189 = vmatprep.subr.bf16.mxu0 %v934
        %1190 = vmatpush1.bf16.msra.mxu0 %v933
        %1191 = vmatprep.subr.bf16.mxu0 %v938
        %1192 = vmatpush1.bf16.msra.mxu0 %v937
        %1193 = vmatprep.subr.bf16.mxu0 %v942
        %1194 = vmatpush1.bf16.msra.mxu0 %v941
        %1195 = vmatprep.subr.bf16.mxu0 %v946
        %1196 = vmatpush1.bf16.msra.mxu0 %v945
        %1197 = vmatprep.subr.bf16.mxu0 %v950
        %1198 = vmatpush1.bf16.msra.mxu0 %v949
        %1199 = vmatprep.subr.bf16.mxu0 %v954
        %1200 = vmatpush1.bf16.msra.mxu0 %v953
        %1201 = vmatprep.subr.bf16.mxu0 %v958
        %1202 = vmatpush1.bf16.msra.mxu0 %v957
        %1203 = vmatprep.subr.bf16.mxu0 %v962
        %1204 = vmatpush1.bf16.msra.mxu0 %v961
        %1205 = vmatprep.subr.bf16.mxu0 %v966
        %1206 = vmatpush1.bf16.msra.mxu0 %v965
        %1207 = vmatprep.subr.bf16.mxu0 %v970
        %1208 = vmatpush1.bf16.msra.mxu0 %v969
        %1209 = vmatprep.subr.bf16.mxu0 %v974
        %1210 = vmatpush1.bf16.msra.mxu0 %v973
        %1211 = vmatprep.subr.bf16.mxu0 %v978
        %1212 = vmatpush1.bf16.msra.mxu0 %v977
        %1213 = vmatprep.subr.bf16.mxu0 %v982
        %1214 = vmatpush1.bf16.msra.mxu0 %v981
        %1215 = vmatprep.subr.bf16.mxu0 %v986
        %1216 = vmatpush1.bf16.msra.mxu0 %v985
        %1217 = vmatprep.subr.bf16.mxu0 %v990
        %1218 = vmatpush1.bf16.msra.mxu0 %v989
        %1219 = vmatprep.subr.bf16.mxu0 %v994
        %1220 = vmatpush1.bf16.msra.mxu0 %v993
        %1221 = vmatprep.mubr.bf16.mxu0 %v486
        %1222 = vmatmul.mubr.bf16.gmra.mrb[0].mxu0 %v485
        %v1223 = vpop.f32.mrb[0].mxu0
        %v1224 = vadd.f32 %v372, %v1223
        %v1225 = vpop.f32.mrb[0].mxu0
        %v1226 = vadd.f32 %v376, %v1225
        %v1227 = vpop.f32.mrb[0].mxu0
        %v1228 = vadd.f32 %v372, %v1227
        %v1229 = vpop.f32.mrb[0].mxu0
        %v1230 = vadd.f32 %v376, %v1229
        %1231 = vmatprep.mubr.bf16.mxu0 %v490
        %1232 = vmatmul.mubr.bf16.gmra.mrb[0].mxu0 %v489
        %v1233 = vpop.f32.mrb[0].mxu0
        %v1234 = vadd.f32 %v372, %v1233
        %v1235 = vpop.f32.mrb[0].mxu0
        %v1236 = vadd.f32 %v376, %v1235
        %v1237 = vpop.f32.mrb[0].mxu0
        %v1238 = vadd.f32 %v372, %v1237
        %v1239 = vpop.f32.mrb[0].mxu0
        %v1240 = vadd.f32 %v376, %v1239
        %1241 = vmatprep.mubr.bf16.mxu0 %v494
        %1242 = vmatmul.mubr.bf16.gmra.mrb[0].mxu0 %v493
        %v1243 = vpop.f32.mrb[0].mxu0
        %v1244 = vadd.f32 %v372, %v1243
        %v1245 = vpop.f32.mrb[0].mxu0
        %v1246 = vadd.f32 %v376, %v1245
        %v1247 = vpop.f32.mrb[0].mxu0
        %v1248 = vadd.f32 %v372, %v1247
        %v1249 = vpop.f32.mrb[0].mxu0
        %v1250 = vadd.f32 %v376, %v1249
        %1251 = vmatprep.mubr.bf16.mxu0 %v498
        %1252 = vmatmul.mubr.bf16.gmra.mrb[0].mxu0 %v497
        %v1253 = vpop.f32.mrb[0].mxu0
        %v1254 = vadd.f32 %v372, %v1253
        %v1255 = vpop.f32.mrb[0].mxu0
        %v1256 = vadd.f32 %v376, %v1255
        %v1257 = vpop.f32.mrb[0].mxu0
        %v1258 = vadd.f32 %v372, %v1257
        %v1259 = vpop.f32.mrb[0].mxu0
        %v1260 = vadd.f32 %v376, %v1259
        %1261 = vmatprep.mubr.bf16.mxu0 %v502
        %1262 = vmatmul.mubr.bf16.gmra.mrb[0].mxu0 %v501
        %v1263 = vpop.f32.mrb[0].mxu0
        %v1264 = vadd.f32 %v372, %v1263
        %v1265 = vpop.f32.mrb[0].mxu0
        %v1266 = vadd.f32 %v376, %v1265
        %v1267 = vpop.f32.mrb[0].mxu0
        %v1268 = vadd.f32 %v372, %v1267
        %v1269 = vpop.f32.mrb[0].mxu0
        %v1270 = vadd.f32 %v376, %v1269
        %1271 = vmatprep.mubr.bf16.mxu0 %v506
        %1272 = vmatmul.mubr.bf16.gmra.mrb[0].mxu0 %v505
        %v1273 = vpop.f32.mrb[0].mxu0
        %v1274 = vadd.f32 %v372, %v1273
        %v1275 = vpop.f32.mrb[0].mxu0
        %v1276 = vadd.f32 %v376, %v1275
        %v1277 = vpop.f32.mrb[0].mxu0
        %v1278 = vadd.f32 %v372, %v1277
        %v1279 = vpop.f32.mrb[0].mxu0
        %v1280 = vadd.f32 %v376, %v1279
        %1281 = vmatprep.mubr.bf16.mxu0 %v510
        %1282 = vmatmul.mubr.bf16.gmra.mrb[0].mxu0 %v509
        %v1283 = vpop.f32.mrb[0].mxu0
        %v1284 = vadd.f32 %v372, %v1283
        %v1285 = vpop.f32.mrb[0].mxu0
        %v1286 = vadd.f32 %v376, %v1285
        %v1287 = vpop.f32.mrb[0].mxu0
        %v1288 = vadd.f32 %v372, %v1287
        %v1289 = vpop.f32.mrb[0].mxu0
        %v1290 = vadd.f32 %v376, %v1289
        %1291 = vmatprep.mubr.bf16.mxu0 %v514
        %1292 = vmatmul.mubr.bf16.gmra.mrb[0].mxu0 %v513
        %v1293 = vpop.f32.mrb[0].mxu0
        %v1294 = vadd.f32 %v372, %v1293
        %v1295 = vpop.f32.mrb[0].mxu0
        %v1296 = vadd.f32 %v376, %v1295
        %v1297 = vpop.f32.mrb[0].mxu0
        %v1298 = vadd.f32 %v372, %v1297
        %v1299 = vpop.f32.mrb[0].mxu0
        %v1300 = vadd.f32 %v376, %v1299
        %1301 = vdwg.mxu0
        %1302 = vmatprep.subr.bf16.mxu0 %v998
        %1303 = vmatpush1.bf16.msra.mxu0 %v997
        %1304 = vmatprep.subr.bf16.mxu0 %v1002
        %1305 = vmatpush1.bf16.msra.mxu0 %v1001
        %1306 = vmatprep.subr.bf16.mxu0 %v1006
        %1307 = vmatpush1.bf16.msra.mxu0 %v1005
        %1308 = vmatprep.subr.bf16.mxu0 %v1010
        %1309 = vmatpush1.bf16.msra.mxu0 %v1009
        %1310 = vmatprep.subr.bf16.mxu0 %v1014
        %1311 = vmatpush1.bf16.msra.mxu0 %v1013
        %1312 = vmatprep.subr.bf16.mxu0 %v1018
        %1313 = vmatpush1.bf16.msra.mxu0 %v1017
        %1314 = vmatprep.subr.bf16.mxu0 %v1022
        %1315 = vmatpush1.bf16.msra.mxu0 %v1021
        %1316 = vmatprep.subr.bf16.mxu0 %v1026
        %1317 = vmatpush1.bf16.msra.mxu0 %v1025
        %1318 = vmatprep.subr.bf16.mxu0 %v1030
        %1319 = vmatpush1.bf16.msra.mxu0 %v1029
        %1320 = vmatprep.subr.bf16.mxu0 %v1034
        %1321 = vmatpush1.bf16.msra.mxu0 %v1033
        %1322 = vmatprep.subr.bf16.mxu0 %v1038
        %1323 = vmatpush1.bf16.msra.mxu0 %v1037
        %1324 = vmatprep.subr.bf16.mxu0 %v1042
        %1325 = vmatpush1.bf16.msra.mxu0 %v1041
        %1326 = vmatprep.subr.bf16.mxu0 %v1046
        %1327 = vmatpush1.bf16.msra.mxu0 %v1045
        %1328 = vmatprep.subr.bf16.mxu0 %v1050
        %1329 = vmatpush1.bf16.msra.mxu0 %v1049
        %1330 = vmatprep.subr.bf16.mxu0 %v1054
        %1331 = vmatpush1.bf16.msra.mxu0 %v1053
        %1332 = vmatprep.subr.bf16.mxu0 %v1058
        %1333 = vmatpush1.bf16.msra.mxu0 %v1057
        %1334 = vmatprep.mubr.bf16.mxu0 %v488
        %1335 = vmatmul.mubr.bf16.gmra.mrb[0].mxu0 %v487
        %v1336 = vpop.f32.mrb[0].mxu0
        %v1337 = vadd.f32 %v1224, %v1336
        %v1338 = vpop.f32.mrb[0].mxu0
        %v1339 = vadd.f32 %v1226, %v1338
        %v1340 = vpop.f32.mrb[0].mxu0
        %v1341 = vadd.f32 %v1228, %v1340
        %v1342 = vpop.f32.mrb[0].mxu0
        %v1343 = vadd.f32 %v1230, %v1342
        %1344 = vmatprep.mubr.bf16.mxu0 %v492
        %1345 = vmatmul.mubr.bf16.gmra.mrb[0].mxu0 %v491
        %v1346 = vpop.f32.mrb[0].mxu0
        %v1347 = vadd.f32 %v1234, %v1346
        %v1348 = vpop.f32.mrb[0].mxu0
        %v1349 = vadd.f32 %v1236, %v1348
        %v1350 = vpop.f32.mrb[0].mxu0
        %v1351 = vadd.f32 %v1238, %v1350
        %v1352 = vpop.f32.mrb[0].mxu0
        %v1353 = vadd.f32 %v1240, %v1352
        %1354 = vmatprep.mubr.bf16.mxu0 %v496
        %1355 = vmatmul.mubr.bf16.gmra.mrb[0].mxu0 %v495
        %v1356 = vpop.f32.mrb[0].mxu0
        %v1357 = vadd.f32 %v1244, %v1356
        %v1358 = vpop.f32.mrb[0].mxu0
        %v1359 = vadd.f32 %v1246, %v1358
        %v1360 = vpop.f32.mrb[0].mxu0
        %v1361 = vadd.f32 %v1248, %v1360
        %v1362 = vpop.f32.mrb[0].mxu0
        %v1363 = vadd.f32 %v1250, %v1362
        %1364 = vmatprep.mubr.bf16.mxu0 %v500
        %1365 = vmatmul.mubr.bf16.gmra.mrb[0].mxu0 %v499
        %v1366 = vpop.f32.mrb[0].mxu0
        %v1367 = vadd.f32 %v1254, %v1366
        %v1368 = vpop.f32.mrb[0].mxu0
        %v1369 = vadd.f32 %v1256, %v1368
        %v1370 = vpop.f32.mrb[0].mxu0
        %v1371 = vadd.f32 %v1258, %v1370
        %v1372 = vpop.f32.mrb[0].mxu0
        %v1373 = vadd.f32 %v1260, %v1372
        %1374 = vmatprep.mubr.bf16.mxu0 %v504
        %1375 = vmatmul.mubr.bf16.gmra.mrb[0].mxu0 %v503
        %v1376 = vpop.f32.mrb[0].mxu0
        %v1377 = vadd.f32 %v1264, %v1376
        %v1378 = vpop.f32.mrb[0].mxu0
        %v1379 = vadd.f32 %v1266, %v1378
        %v1380 = vpop.f32.mrb[0].mxu0
        %v1381 = vadd.f32 %v1268, %v1380
        %v1382 = vpop.f32.mrb[0].mxu0
        %v1383 = vadd.f32 %v1270, %v1382
        %1384 = vmatprep.mubr.bf16.mxu0 %v508
        %1385 = vmatmul.mubr.bf16.gmra.mrb[0].mxu0 %v507
        %v1386 = vpop.f32.mrb[0].mxu0
        %v1387 = vadd.f32 %v1274, %v1386
        %v1388 = vpop.f32.mrb[0].mxu0
        %v1389 = vadd.f32 %v1276, %v1388
        %v1390 = vpop.f32.mrb[0].mxu0
        %v1391 = vadd.f32 %v1278, %v1390
        %v1392 = vpop.f32.mrb[0].mxu0
        %v1393 = vadd.f32 %v1280, %v1392
        %1394 = vmatprep.mubr.bf16.mxu0 %v512
        %1395 = vmatmul.mubr.bf16.gmra.mrb[0].mxu0 %v511
        %v1396 = vpop.f32.mrb[0].mxu0
        %v1397 = vadd.f32 %v1284, %v1396
        %v1398 = vpop.f32.mrb[0].mxu0
        %v1399 = vadd.f32 %v1286, %v1398
        %v1400 = vpop.f32.mrb[0].mxu0
        %v1401 = vadd.f32 %v1288, %v1400
        %v1402 = vpop.f32.mrb[0].mxu0
        %v1403 = vadd.f32 %v1290, %v1402
        %1404 = vmatprep.mubr.bf16.mxu0 %v516
        %1405 = vmatmul.mubr.bf16.gmra.mrb[0].mxu0 %v515
        %v1406 = vpop.f32.mrb[0].mxu0
        %v1407 = vadd.f32 %v1294, %v1406
        %v1408 = vpop.f32.mrb[0].mxu0
        %v1409 = vadd.f32 %v1296, %v1408
        %v1410 = vpop.f32.mrb[0].mxu0
        %v1411 = vadd.f32 %v1298, %v1410
        %v1412 = vpop.f32.mrb[0].mxu0
        %v1413 = vadd.f32 %v1300, %v1412
        %1414 = vdwg.mxu0
        %1415 = vmatprep.subr.bf16.mxu0 %v936
        %1416 = vmatpush1.bf16.msra.mxu0 %v935
        %1417 = vmatprep.subr.bf16.mxu0 %v940
        %1418 = vmatpush1.bf16.msra.mxu0 %v939
        %1419 = vmatprep.subr.bf16.mxu0 %v944
        %1420 = vmatpush1.bf16.msra.mxu0 %v943
        %1421 = vmatprep.subr.bf16.mxu0 %v948
        %1422 = vmatpush1.bf16.msra.mxu0 %v947
        %1423 = vmatprep.subr.bf16.mxu0 %v952
        %1424 = vmatpush1.bf16.msra.mxu0 %v951
        %1425 = vmatprep.subr.bf16.mxu0 %v956
        %1426 = vmatpush1.bf16.msra.mxu0 %v955
        %1427 = vmatprep.subr.bf16.mxu0 %v960
        %1428 = vmatpush1.bf16.msra.mxu0 %v959
        %1429 = vmatprep.subr.bf16.mxu0 %v964
        %1430 = vmatpush1.bf16.msra.mxu0 %v963
        %1431 = vmatprep.subr.bf16.mxu0 %v968
        %1432 = vmatpush1.bf16.msra.mxu0 %v967
        %1433 = vmatprep.subr.bf16.mxu0 %v972
        %1434 = vmatpush1.bf16.msra.mxu0 %v971
        %1435 = vmatprep.subr.bf16.mxu0 %v976
        %1436 = vmatpush1.bf16.msra.mxu0 %v975
        %1437 = vmatprep.subr.bf16.mxu0 %v980
        %1438 = vmatpush1.bf16.msra.mxu0 %v979
        %1439 = vmatprep.subr.bf16.mxu0 %v984
        %1440 = vmatpush1.bf16.msra.mxu0 %v983
        %1441 = vmatprep.subr.bf16.mxu0 %v988
        %1442 = vmatpush1.bf16.msra.mxu0 %v987
        %1443 = vmatprep.subr.bf16.mxu0 %v992
        %1444 = vmatpush1.bf16.msra.mxu0 %v991
        %1445 = vmatprep.subr.bf16.mxu0 %v996
        %1446 = vmatpush1.bf16.msra.mxu0 %v995
        %1447 = vmatprep.mubr.bf16.mxu0 %v486
        %1448 = vmatmul.mubr.bf16.gmra.mrb[0].mxu0 %v485
        %v1449 = vpop.f32.mrb[0].mxu0
        %v1450 = vadd.f32 %v380, %v1449
        %v1451 = vpop.f32.mrb[0].mxu0
        %v1452 = vadd.f32 %v384, %v1451
        %v1453 = vpop.f32.mrb[0].mxu0
        %v1454 = vadd.f32 %v380, %v1453
        %v1455 = vpop.f32.mrb[0].mxu0
        %v1456 = vadd.f32 %v384, %v1455
        %1457 = vmatprep.mubr.bf16.mxu0 %v490
        %1458 = vmatmul.mubr.bf16.gmra.mrb[0].mxu0 %v489
        %v1459 = vpop.f32.mrb[0].mxu0
        %v1460 = vadd.f32 %v380, %v1459
        %v1461 = vpop.f32.mrb[0].mxu0
        %v1462 = vadd.f32 %v384, %v1461
        %v1463 = vpop.f32.mrb[0].mxu0
        %v1464 = vadd.f32 %v380, %v1463
        %v1465 = vpop.f32.mrb[0].mxu0
        %v1466 = vadd.f32 %v384, %v1465
        %1467 = vmatprep.mubr.bf16.mxu0 %v494
        %1468 = vmatmul.mubr.bf16.gmra.mrb[0].mxu0 %v493
        %v1469 = vpop.f32.mrb[0].mxu0
        %v1470 = vadd.f32 %v380, %v1469
        %v1471 = vpop.f32.mrb[0].mxu0
        %v1472 = vadd.f32 %v384, %v1471
        %v1473 = vpop.f32.mrb[0].mxu0
        %v1474 = vadd.f32 %v380, %v1473
        %v1475 = vpop.f32.mrb[0].mxu0
        %v1476 = vadd.f32 %v384, %v1475
        %1477 = vmatprep.mubr.bf16.mxu0 %v498
        %1478 = vmatmul.mubr.bf16.gmra.mrb[0].mxu0 %v497
        %v1479 = vpop.f32.mrb[0].mxu0
        %v1480 = vadd.f32 %v380, %v1479
        %v1481 = vpop.f32.mrb[0].mxu0
        %v1482 = vadd.f32 %v384, %v1481
        %v1483 = vpop.f32.mrb[0].mxu0
        %v1484 = vadd.f32 %v380, %v1483
        %v1485 = vpop.f32.mrb[0].mxu0
        %v1486 = vadd.f32 %v384, %v1485
        %1487 = vmatprep.mubr.bf16.mxu0 %v502
        %1488 = vmatmul.mubr.bf16.gmra.mrb[0].mxu0 %v501
        %v1489 = vpop.f32.mrb[0].mxu0
        %v1490 = vadd.f32 %v380, %v1489
        %v1491 = vpop.f32.mrb[0].mxu0
        %v1492 = vadd.f32 %v384, %v1491
        %v1493 = vpop.f32.mrb[0].mxu0
        %v1494 = vadd.f32 %v380, %v1493
        %v1495 = vpop.f32.mrb[0].mxu0
        %v1496 = vadd.f32 %v384, %v1495
        %1497 = vmatprep.mubr.bf16.mxu0 %v506
        %1498 = vmatmul.mubr.bf16.gmra.mrb[0].mxu0 %v505
        %v1499 = vpop.f32.mrb[0].mxu0
        %v1500 = vadd.f32 %v380, %v1499
        %v1501 = vpop.f32.mrb[0].mxu0
        %v1502 = vadd.f32 %v384, %v1501
        %v1503 = vpop.f32.mrb[0].mxu0
        %v1504 = vadd.f32 %v380, %v1503
        %v1505 = vpop.f32.mrb[0].mxu0
        %v1506 = vadd.f32 %v384, %v1505
        %1507 = vmatprep.mubr.bf16.mxu0 %v510
        %1508 = vmatmul.mubr.bf16.gmra.mrb[0].mxu0 %v509
        %v1509 = vpop.f32.mrb[0].mxu0
        %v1510 = vadd.f32 %v380, %v1509
        %v1511 = vpop.f32.mrb[0].mxu0
        %v1512 = vadd.f32 %v384, %v1511
        %v1513 = vpop.f32.mrb[0].mxu0
        %v1514 = vadd.f32 %v380, %v1513
        %v1515 = vpop.f32.mrb[0].mxu0
        %v1516 = vadd.f32 %v384, %v1515
        %1517 = vmatprep.mubr.bf16.mxu0 %v514
        %1518 = vmatmul.mubr.bf16.gmra.mrb[0].mxu0 %v513
        %v1519 = vpop.f32.mrb[0].mxu0
        %v1520 = vadd.f32 %v380, %v1519
        %v1521 = vpop.f32.mrb[0].mxu0
        %v1522 = vadd.f32 %v384, %v1521
        %v1523 = vpop.f32.mrb[0].mxu0
        %v1524 = vadd.f32 %v380, %v1523
        %v1525 = vpop.f32.mrb[0].mxu0
        %v1526 = vadd.f32 %v384, %v1525
        %1527 = vdwg.mxu0
        %1528 = vmatprep.subr.bf16.mxu0 %v1000
        %1529 = vmatpush1.bf16.msra.mxu0 %v999
        %1530 = vmatprep.subr.bf16.mxu0 %v1004
        %1531 = vmatpush1.bf16.msra.mxu0 %v1003
        %1532 = vmatprep.subr.bf16.mxu0 %v1008
        %1533 = vmatpush1.bf16.msra.mxu0 %v1007
        %1534 = vmatprep.subr.bf16.mxu0 %v1012
        %1535 = vmatpush1.bf16.msra.mxu0 %v1011
        %1536 = vmatprep.subr.bf16.mxu0 %v1016
        %1537 = vmatpush1.bf16.msra.mxu0 %v1015
        %1538 = vmatprep.subr.bf16.mxu0 %v1020
        %1539 = vmatpush1.bf16.msra.mxu0 %v1019
        %1540 = vmatprep.subr.bf16.mxu0 %v1024
        %1541 = vmatpush1.bf16.msra.mxu0 %v1023
        %1542 = vmatprep.subr.bf16.mxu0 %v1028
        %1543 = vmatpush1.bf16.msra.mxu0 %v1027
        %1544 = vmatprep.subr.bf16.mxu0 %v1032
        %1545 = vmatpush1.bf16.msra.mxu0 %v1031
        %1546 = vmatprep.subr.bf16.mxu0 %v1036
        %1547 = vmatpush1.bf16.msra.mxu0 %v1035
        %1548 = vmatprep.subr.bf16.mxu0 %v1040
        %1549 = vmatpush1.bf16.msra.mxu0 %v1039
        %1550 = vmatprep.subr.bf16.mxu0 %v1044
        %1551 = vmatpush1.bf16.msra.mxu0 %v1043
        %1552 = vmatprep.subr.bf16.mxu0 %v1048
        %1553 = vmatpush1.bf16.msra.mxu0 %v1047
        %1554 = vmatprep.subr.bf16.mxu0 %v1052
        %1555 = vmatpush1.bf16.msra.mxu0 %v1051
        %1556 = vmatprep.subr.bf16.mxu0 %v1056
        %1557 = vmatpush1.bf16.msra.mxu0 %v1055
        %1558 = vmatprep.subr.bf16.mxu0 %v1060
        %1559 = vmatpush1.bf16.msra.mxu0 %v1059
        %1560 = vmatprep.mubr.bf16.mxu0 %v488
        %1561 = vmatmul.mubr.bf16.gmra.mrb[0].mxu0 %v487
        %v1562 = vpop.f32.mrb[0].mxu0
        %v1563 = vadd.f32 %v1450, %v1562
        %v1564 = vpop.f32.mrb[0].mxu0
        %v1565 = vadd.f32 %v1452, %v1564
        %v1566 = vpop.f32.mrb[0].mxu0
        %v1567 = vadd.f32 %v1454, %v1566
        %v1568 = vpop.f32.mrb[0].mxu0
        %v1569 = vadd.f32 %v1456, %v1568
        %1570 = vmatprep.mubr.bf16.mxu0 %v492
        %1571 = vmatmul.mubr.bf16.gmra.mrb[0].mxu0 %v491
        %v1572 = vpop.f32.mrb[0].mxu0
        %v1573 = vadd.f32 %v1460, %v1572
        %v1574 = vpop.f32.mrb[0].mxu0
        %v1575 = vadd.f32 %v1462, %v1574
        %v1576 = vpop.f32.mrb[0].mxu0
        %v1577 = vadd.f32 %v1464, %v1576
        %v1578 = vpop.f32.mrb[0].mxu0
        %v1579 = vadd.f32 %v1466, %v1578
        %1580 = vmatprep.mubr.bf16.mxu0 %v496
        %1581 = vmatmul.mubr.bf16.gmra.mrb[0].mxu0 %v495
        %v1582 = vpop.f32.mrb[0].mxu0
        %v1583 = vadd.f32 %v1470, %v1582
        %v1584 = vpop.f32.mrb[0].mxu0
        %v1585 = vadd.f32 %v1472, %v1584
        %v1586 = vpop.f32.mrb[0].mxu0
        %v1587 = vadd.f32 %v1474, %v1586
        %v1588 = vpop.f32.mrb[0].mxu0
        %v1589 = vadd.f32 %v1476, %v1588
        %1590 = vmatprep.mubr.bf16.mxu0 %v500
        %1591 = vmatmul.mubr.bf16.gmra.mrb[0].mxu0 %v499
        %v1592 = vpop.f32.mrb[0].mxu0
        %v1593 = vadd.f32 %v1480, %v1592
        %v1594 = vpop.f32.mrb[0].mxu0
        %v1595 = vadd.f32 %v1482, %v1594
        %v1596 = vpop.f32.mrb[0].mxu0
        %v1597 = vadd.f32 %v1484, %v1596
        %v1598 = vpop.f32.mrb[0].mxu0
        %v1599 = vadd.f32 %v1486, %v1598
        %1600 = vmatprep.mubr.bf16.mxu0 %v504
        %1601 = vmatmul.mubr.bf16.gmra.mrb[0].mxu0 %v503
        %v1602 = vpop.f32.mrb[0].mxu0
        %v1603 = vadd.f32 %v1490, %v1602
        %v1604 = vpop.f32.mrb[0].mxu0
        %v1605 = vadd.f32 %v1492, %v1604
        %v1606 = vpop.f32.mrb[0].mxu0
        %v1607 = vadd.f32 %v1494, %v1606
        %v1608 = vpop.f32.mrb[0].mxu0
        %v1609 = vadd.f32 %v1496, %v1608
        %1610 = vmatprep.mubr.bf16.mxu0 %v508
        %1611 = vmatmul.mubr.bf16.gmra.mrb[0].mxu0 %v507
        %v1612 = vpop.f32.mrb[0].mxu0
        %v1613 = vadd.f32 %v1500, %v1612
        %v1614 = vpop.f32.mrb[0].mxu0
        %v1615 = vadd.f32 %v1502, %v1614
        %v1616 = vpop.f32.mrb[0].mxu0
        %v1617 = vadd.f32 %v1504, %v1616
        %v1618 = vpop.f32.mrb[0].mxu0
        %v1619 = vadd.f32 %v1506, %v1618
        %1620 = vmatprep.mubr.bf16.mxu0 %v512
        %1621 = vmatmul.mubr.bf16.gmra.mrb[0].mxu0 %v511
        %v1622 = vpop.f32.mrb[0].mxu0
        %v1623 = vadd.f32 %v1510, %v1622
        %v1624 = vpop.f32.mrb[0].mxu0
        %v1625 = vadd.f32 %v1512, %v1624
        %v1626 = vpop.f32.mrb[0].mxu0
        %v1627 = vadd.f32 %v1514, %v1626
        %v1628 = vpop.f32.mrb[0].mxu0
        %v1629 = vadd.f32 %v1516, %v1628
        %1630 = vmatprep.mubr.bf16.mxu0 %v516
        %1631 = vmatmul.mubr.bf16.gmra.mrb[0].mxu0 %v515
        %v1632 = vpop.f32.mrb[0].mxu0
        %v1633 = vadd.f32 %v1520, %v1632
        %v1634 = vpop.f32.mrb[0].mxu0
        %v1635 = vadd.f32 %v1522, %v1634
        %v1636 = vpop.f32.mrb[0].mxu0
        %v1637 = vadd.f32 %v1524, %v1636
        %v1638 = vpop.f32.mrb[0].mxu0
        %v1639 = vadd.f32 %v1526, %v1638
        %1640 = vdwg.mxu0
        %v1641 = vmax.f32 %v1337, 0.0
        %v1642 = vmax.f32 %v1339, 0.0
        %v1643 = vmax.f32 %v1563, 0.0
        %v1644 = vmax.f32 %v1565, 0.0
        %v1645 = vmax.f32 %v1341, 0.0
        %v1646 = vmax.f32 %v1343, 0.0
        %v1647 = vmax.f32 %v1567, 0.0
        %v1648 = vmax.f32 %v1569, 0.0
        %v1649 = vmax.f32 %v1347, 0.0
        %v1650 = vmax.f32 %v1349, 0.0
        %v1651 = vmax.f32 %v1573, 0.0
        %v1652 = vmax.f32 %v1575, 0.0
        %v1653 = vmax.f32 %v1351, 0.0
        %v1654 = vmax.f32 %v1353, 0.0
        %v1655 = vmax.f32 %v1577, 0.0
        %v1656 = vmax.f32 %v1579, 0.0
        %v1657 = vmax.f32 %v1357, 0.0
        %v1658 = vmax.f32 %v1359, 0.0
        %v1659 = vmax.f32 %v1583, 0.0
        %v1660 = vmax.f32 %v1585, 0.0
        %v1661 = vmax.f32 %v1361, 0.0
        %v1662 = vmax.f32 %v1363, 0.0
        %v1663 = vmax.f32 %v1587, 0.0
        %v1664 = vmax.f32 %v1589, 0.0
        %v1665 = vmax.f32 %v1367, 0.0
        %v1666 = vmax.f32 %v1369, 0.0
        %v1667 = vmax.f32 %v1593, 0.0
        %v1668 = vmax.f32 %v1595, 0.0
        %v1669 = vmax.f32 %v1371, 0.0
        %v1670 = vmax.f32 %v1373, 0.0
        %v1671 = vmax.f32 %v1597, 0.0
        %v1672 = vmax.f32 %v1599, 0.0
        %v1673 = vmax.f32 %v1377, 0.0
        %v1674 = vmax.f32 %v1379, 0.0
        %v1675 = vmax.f32 %v1603, 0.0
        %v1676 = vmax.f32 %v1605, 0.0
        %v1677 = vmax.f32 %v1381, 0.0
        %v1678 = vmax.f32 %v1383, 0.0
        %v1679 = vmax.f32 %v1607, 0.0
        %v1680 = vmax.f32 %v1609, 0.0
        %v1681 = vmax.f32 %v1387, 0.0
        %v1682 = vmax.f32 %v1389, 0.0
        %v1683 = vmax.f32 %v1613, 0.0
        %v1684 = vmax.f32 %v1615, 0.0
        %v1685 = vmax.f32 %v1391, 0.0
        %v1686 = vmax.f32 %v1393, 0.0
        %v1687 = vmax.f32 %v1617, 0.0
        %v1688 = vmax.f32 %v1619, 0.0
        %v1689 = vmax.f32 %v1397, 0.0
        %v1690 = vmax.f32 %v1399, 0.0
        %v1691 = vmax.f32 %v1623, 0.0
        %v1692 = vmax.f32 %v1625, 0.0
        %v1693 = vmax.f32 %v1401, 0.0
        %v1694 = vmax.f32 %v1403, 0.0
        %v1695 = vmax.f32 %v1627, 0.0
        %v1696 = vmax.f32 %v1629, 0.0
        %v1697 = vmax.f32 %v1407, 0.0
        %v1698 = vmax.f32 %v1409, 0.0
        %v1699 = vmax.f32 %v1633, 0.0
        %v1700 = vmax.f32 %v1635, 0.0
        %v1701 = vmax.f32 %v1411, 0.0
        %v1702 = vmax.f32 %v1413, 0.0
        %v1703 = vmax.f32 %v1637, 0.0
        %v1704 = vmax.f32 %v1639, 0.0
        %1705 = vst [vmem:[%s204] sm:$0xff] %v1641
        %1706 = vst [vmem:[%s204 + $0x8] sm:$0xff] %v1642
        %1707 = vst [vmem:[%s204 + $0x10] sm:$0xff] %v1643
        %1708 = vst [vmem:[%s204 + $0x18] sm:$0xff] %v1644
        %1709 = vst [vmem:[%s204 + $0x20] sm:$0xff] %v1645
        %1710 = vst [vmem:[%s204 + $0x28] sm:$0xff] %v1646
        %1711 = vst [vmem:[%s204 + $0x30] sm:$0xff] %v1647
        %1712 = vst [vmem:[%s204 + $0x38] sm:$0xff] %v1648
        %1713 = vst [vmem:[%s204 + $0x40] sm:$0xff] %v1649
        %1714 = vst [vmem:[%s204 + $0x48] sm:$0xff] %v1650
        %1715 = vst [vmem:[%s204 + $0x50] sm:$0xff] %v1651
        %1716 = vst [vmem:[%s204 + $0x58] sm:$0xff] %v1652
        %1717 = vst [vmem:[%s204 + $0x60] sm:$0xff] %v1653
        %1718 = vst [vmem:[%s204 + $0x68] sm:$0xff] %v1654
        %1719 = vst [vmem:[%s204 + $0x70] sm:$0xff] %v1655
        %1720 = vst [vmem:[%s204 + $0x78] sm:$0xff] %v1656
        %1721 = vst [vmem:[%s204 + $0x80] sm:$0xff] %v1657
        %1722 = vst [vmem:[%s204 + $0x88] sm:$0xff] %v1658
        %1723 = vst [vmem:[%s204 + $0x90] sm:$0xff] %v1659
        %1724 = vst [vmem:[%s204 + $0x98] sm:$0xff] %v1660
        %1725 = vst [vmem:[%s204 + $0xa0] sm:$0xff] %v1661
        %1726 = vst [vmem:[%s204 + $0xa8] sm:$0xff] %v1662
        %1727 = vst [vmem:[%s204 + $0xb0] sm:$0xff] %v1663
        %1728 = vst [vmem:[%s204 + $0xb8] sm:$0xff] %v1664
        %1729 = vst [vmem:[%s204 + $0xc0] sm:$0xff] %v1665
        %1730 = vst [vmem:[%s204 + $0xc8] sm:$0xff] %v1666
        %1731 = vst [vmem:[%s204 + $0xd0] sm:$0xff] %v1667
        %1732 = vst [vmem:[%s204 + $0xd8] sm:$0xff] %v1668
        %1733 = vst [vmem:[%s204 + $0xe0] sm:$0xff] %v1669
        %1734 = vst [vmem:[%s204 + $0xe8] sm:$0xff] %v1670
        %1735 = vst [vmem:[%s204 + $0xf0] sm:$0xff] %v1671
        %1736 = vst [vmem:[%s204 + $0xf8] sm:$0xff] %v1672
        %1737 = vst [vmem:[%s204 + $0x100] sm:$0xff] %v1673
        %1738 = vst [vmem:[%s204 + $0x108] sm:$0xff] %v1674
        %1739 = vst [vmem:[%s204 + $0x110] sm:$0xff] %v1675
        %1740 = vst [vmem:[%s204 + $0x118] sm:$0xff] %v1676
        %1741 = vst [vmem:[%s204 + $0x120] sm:$0xff] %v1677
        %1742 = vst [vmem:[%s204 + $0x128] sm:$0xff] %v1678
        %1743 = vst [vmem:[%s204 + $0x130] sm:$0xff] %v1679
        %1744 = vst [vmem:[%s204 + $0x138] sm:$0xff] %v1680
        %1745 = vst [vmem:[%s204 + $0x140] sm:$0xff] %v1681
        %1746 = vst [vmem:[%s204 + $0x148] sm:$0xff] %v1682
        %1747 = vst [vmem:[%s204 + $0x150] sm:$0xff] %v1683
        %1748 = vst [vmem:[%s204 + $0x158] sm:$0xff] %v1684
        %1749 = vst [vmem:[%s204 + $0x160] sm:$0xff] %v1685
        %1750 = vst [vmem:[%s204 + $0x168] sm:$0xff] %v1686
        %1751 = vst [vmem:[%s204 + $0x170] sm:$0xff] %v1687
        %1752 = vst [vmem:[%s204 + $0x178] sm:$0xff] %v1688
        %1753 = vst [vmem:[%s204 + $0x180] sm:$0xff] %v1689
        %1754 = vst [vmem:[%s204 + $0x188] sm:$0xff] %v1690
        %1755 = vst [vmem:[%s204 + $0x190] sm:$0xff] %v1691
        %1756 = vst [vmem:[%s204 + $0x198] sm:$0xff] %v1692
        %1757 = vst [vmem:[%s204 + $0x1a0] sm:$0xff] %v1693
        %1758 = vst [vmem:[%s204 + $0x1a8] sm:$0xff] %v1694
        %1759 = vst [vmem:[%s204 + $0x1b0] sm:$0xff] %v1695
        %1760 = vst [vmem:[%s204 + $0x1b8] sm:$0xff] %v1696
        %1761 = vst [vmem:[%s204 + $0x1c0] sm:$0xff] %v1697
        %1762 = vst [vmem:[%s204 + $0x1c8] sm:$0xff] %v1698
        %1763 = vst [vmem:[%s204 + $0x1d0] sm:$0xff] %v1699
        %1764 = vst [vmem:[%s204 + $0x1d8] sm:$0xff] %v1700
        %1765 = vst [vmem:[%s204 + $0x1e0] sm:$0xff] %v1701
        %1766 = vst [vmem:[%s204 + $0x1e8] sm:$0xff] %v1702
        %1767 = vst [vmem:[%s204 + $0x1f0] sm:$0xff] %v1703
        %1768 = vst [vmem:[%s204 + $0x1f8] sm:$0xff] %v1704
        %s1769 = sand.u32 %s97, 1
        %s1770 = scalar_lea.sflag [#allocation4], %s1769
        %s1771 = sand.u32 %s97, 1
        %s1772 = smul.addr %s1771, 512
        %s1773 = scalar_lea.vmem [#allocation7], %s1772
        // Predicated region
        $region41: #{tpu_custom_call.1} parent=31 // pred_check
          %p1774 = pneg %p107
        $region42: #{tpu_custom_call.1} parent=31 // pred_check_branch
          %1776 = sbr.rel (%p1774) target = $region44
        $region43: #{tpu_custom_call.1} parent=31 // pred_region
          %s1777 = smul.u32 16, %s21
          %s1779 = ssub.s32 8192, 8192
          %1780 = vsyncadd %s1770, %s1779
          %s1781 = smul.addr %s1777, 4
          %s1782 = smul.addr %s1781, 128
          %s1783 = scalar_lea.hbm %s3, %s1782
          %s1784 = sshll.u32 %s1773, 4
          %s1785 = int_to_ptr.vmem [resolvable:$true] %s1784
          %1790 = dma.vmem_to_hbm [thread:$0]  %s1785, 8192, %s1783, %s1770, 512, 512, 32
        $region44: #{tpu_custom_call.1} parent=31 // pred_fallthru
          _
      $region32: #{tpu_custom_call.1} parent=5 // pred_fallthru
        _
      %p1791 = scmp.le.s32.totalorder 2, %s16
      // Predicated region
      $region45: #{tpu_custom_call.1} parent=5 // pred_check
        %p1792 = pneg %p1791
      $region46: #{tpu_custom_call.1} parent=5 // pred_check_branch
        %1794 = sbr.rel (%p1792) target = $region48
      $region47: #{tpu_custom_call.1} parent=5 // pred_region
        %s1795 = ssub.s32 %s16, 2
        // Predicated region
        $region49: #{tpu_custom_call.1} parent=47 // pred_check
          %p1796 = pneg %p113
        $region50: #{tpu_custom_call.1} parent=47 // pred_check_branch
          %1798 = sbr.rel (%p1796) target = $region52
        $region51: #{tpu_custom_call.1} parent=47 // pred_region
          %s1799 = sand.u32 %s98, 1
          %s1800 = scalar_lea.sflag [#allocation4], %s1799
          %s1801 = sand.u32 %s98, 1
          %s1802 = smul.addr %s1801, 512
          %s1803 = scalar_lea.vmem [#allocation7], %s1802
          %1804 = dma.done %s1800, 8192
        $region52: #{tpu_custom_call.1} parent=47 // pred_fallthru
          _
      $region48: #{tpu_custom_call.1} parent=5 // pred_fallthru
        _
    $region6: #{tpu_custom_call.1} parent=1 // loop_footer
      %s20 = sadd.s32 1, %s16
    $region7: #{tpu_custom_call.1} parent=1 // loop_footer_branch
      %15 = sbr.rel target = $region3
    $region8: #{tpu_custom_call.1} parent=1 // loop_exit
      _
    %1805 = vsyncpa [#allocation3], 1
    %s1806 = scalar_lea.sflag [#allocation3], 1
    %1807 = vsyncpa %s1806, 1
    %1808 = vsyncpa [#allocation6], 1
    %1809 = vsyncpa [#allocation4], 1
    %s1810 = scalar_lea.sflag [#allocation4], 1
    %1811 = vsyncpa %s1810, 1

</llo_original>
